<compile_context>
chip_gen: v6e
topology: v6e:2x2x1
jax: 0.10.0
libtpu: 0.0.40
codegen_flags: <defaults>
</compile_context>

<pallas_src>
import jax
import jax.numpy as jnp
from jax.experimental import pallas as pl
from jax.experimental.pallas import tpu as pltpu

# ---- model dimensions (from the PyTorch `params` class) ----
LATENT_DIM = 5     # decoder input features
H_SIZES = 40       # hidden width
INPUT_DIM = 40     # decoder output features
NEG_SLOPE = 0.01   # nn.LeakyReLU default negative_slope

# ---- padded, lane-dense layout ----
LANE = 128                 # TPU lane width
LAT_PAD = 8                # latent 5 -> 8 (sublane aligned)
TB_DEFAULT = 128           # batch tile (128 saturates v5e MXU; fine on v6e/v7x)

# parameter-slab row layout (all rows are 128 lanes wide, f32)
W1_OFF = 0                 # rows [0, 8)   : w_c  (LAT_PAD x LANE), real (5 x 40)
BIAS_OFF = LAT_PAD         # rows [8, 16)  : b_c in row 8, b_4 in row 9
W2_OFF = 2 * LAT_PAD       # rows [16,144) : w_4  (LANE x LANE), real (40 x 40)
SLAB_ROWS = W2_OFF + LANE  # 144 rows -> 144*128*4 B = 72 KiB in VMEM


def decoder_kernel(x_ref, p_ref, out_ref):
    x = x_ref[...]                                    # (TB, LAT_PAD) f32

    w1 = p_ref[W1_OFF:W1_OFF + LAT_PAD, :]            # (8, 128)
    bias = p_ref[BIAS_OFF:BIAS_OFF + LAT_PAD, :]      # (8, 128), 8-row aligned read
    b1 = bias[0:1, :]                                 # (1, 128)
    b2 = bias[1:2, :]                                 # (1, 128)
    w2 = p_ref[W2_OFF:W2_OFF + LANE, :]               # (128, 128)

    # layer_c + activ_c  (LeakyReLU, slope 0.01)
    h = jnp.dot(x, w1, preferred_element_type=jnp.float32,
                precision=jax.lax.Precision.HIGHEST) + b1
    h = jnp.maximum(h, NEG_SLOPE * h)

    # layer_4
    y = jnp.dot(h, w2, preferred_element_type=jnp.float32,
                precision=jax.lax.Precision.HIGHEST) + b2

    out_ref[...] = y.astype(out_ref.dtype)            # (TB, 128) lane-dense store


def pack_params(w1, b1, w2, b2):
    """Pack (in,out)-layout weights + biases into one zero-padded VMEM slab.

    Call ONCE at init; the returned (144,128) f32 slab is reused on every
    forward call (no per-call slab construction in the hot path).
    NOTE: PyTorch nn.Linear stores weights as (out, in); transpose before
    passing real checkpoints here.
    """
    slab = jnp.zeros((SLAB_ROWS, LANE), jnp.float32)
    slab = slab.at[W1_OFF:W1_OFF + LATENT_DIM, :H_SIZES].set(w1)
    slab = slab.at[BIAS_OFF, :H_SIZES].set(b1)
    slab = slab.at[BIAS_OFF + 1, :INPUT_DIM].set(b2)
    slab = slab.at[W2_OFF:W2_OFF + H_SIZES, :INPUT_DIM].set(w2)
    return slab


def decoder_forward(x, slab, *, tb=TB_DEFAULT):
    """x: (B, LATENT_DIM) f32, slab: packed params -> (B, INPUT_DIM) f32."""
    B, D = x.shape
    assert D == LATENT_DIM

    # Pad batch to a tile multiple and latent axis to sublane width (one op).
    n_blocks = pl.cdiv(B, tb)
    b_pad = n_blocks * tb
    x_pad = jnp.zeros((b_pad, LAT_PAD), jnp.float32).at[:B, :LATENT_DIM].set(x)

    y_pad = pl.pallas_call(
        decoder_kernel,
        out_shape=jax.ShapeDtypeStruct((b_pad, LANE), jnp.float32),
        grid=(n_blocks,),
        in_specs=[
            pl.BlockSpec((tb, LAT_PAD), lambda i: (i, 0)),        # stream x tiles
            pl.BlockSpec((SLAB_ROWS, LANE), lambda i: (0, 0)),    # weights stay resident
        ],
        out_specs=pl.BlockSpec((tb, LANE), lambda i: (i, 0)),
        compiler_params=pltpu.CompilerParams(
            dimension_semantics=("parallel",)),
    )(x_pad, slab)

    # Small XLA slice to the real 40 output columns; skip it if the consumer
    # can use the lane-dense (b_pad, 128) layout directly.
    return y_pad[:B, :INPUT_DIM]


def init_params(key):
    """Deterministic synthetic parameters, stored as (in_features, out_features)."""
    ks = jax.random.split(key, 4)

    def lin(kw, kb, fan_in, fan_out):
        bound = 1.0 / jnp.sqrt(jnp.float32(fan_in))
        w = jax.random.uniform(kw, (fan_in, fan_out), jnp.float32, -bound, bound)
        b = jax.random.uniform(kb, (fan_out,), jnp.float32, -bound, bound)
        return w, b

    w1, b1 = lin(ks[0], ks[1], LATENT_DIM, H_SIZES)   # layer_c
    w2, b2 = lin(ks[2], ks[3], H_SIZES, INPUT_DIM)    # layer_4
    return dict(w1=w1, b1=b1, w2=w2, b2=b2)


def reference_forward(x, p):
    """Pure-JAX reference of the PyTorch Decoder forward."""
    h = x @ p["w1"] + p["b1"]
    h = jnp.where(h > 0, h, NEG_SLOPE * h)
    return h @ p["w2"] + p["b2"]


if __name__ == "__main__":
    key = jax.random.PRNGKey(0)
    kx, kp = jax.random.split(key)

    BATCH = 256   # exercises a 2-step batch grid at TB=128
    x = jax.random.normal(kx, (BATCH, LATENT_DIM), dtype=jnp.float32)
    params = init_params(kp)

    # Parameter slab built once, reused across all forward calls.
    slab = jax.block_until_ready(pack_params(
        params["w1"], params["b1"], params["w2"], params["b2"]))

    fwd = jax.jit(decoder_forward)
    y = fwd(x, slab)
    y = jax.block_until_ready(y)

    y_ref = reference_forward(x, params)
    assert y.shape == (BATCH, INPUT_DIM)
    assert jnp.allclose(y, y_ref, atol=1e-5, rtol=1e-5)

    print("KERNEL_OK")
</pallas_src>

<mosaic_0001>
module attributes {stable_mosaic.version = 11 : i64} {
  func.func @decoder_kernel(%arg0: i32, %arg1: memref<128x8xf32, #tpu.memory_space<vmem>>, %arg2: memref<144x128xf32, #tpu.memory_space<vmem>>, %arg3: memref<128x128xf32, #tpu.memory_space<vmem>>) attributes {dimension_semantics = [#tpu.dimension_semantics<parallel>], iteration_bounds = array<i64: 2>, scalar_prefetch = 0 : i64, scratch_operands = 0 : i64, tpu.core_type = #tpu.core_type<tc>, window_params = [{transform_indices = @transform_0, window_bounds = array<i64: 128, 8>}, {pipeline_mode = #tpu.pipeline_mode<synchronous>, transform_indices = @transform_1, window_bounds = array<i64: 144, 128>}, {transform_indices = @transform_2, window_bounds = array<i64: 128, 128>}]} {
    %c0 = arith.constant 0 : index
    %c0_0 = arith.constant 0 : index
    %0 = vector.load %arg1[%c0, %c0_0] : memref<128x8xf32, #tpu.memory_space<vmem>>, vector<128x8xf32>
    %c0_1 = arith.constant 0 : index
    %c0_2 = arith.constant 0 : index
    %1 = vector.load %arg2[%c0_1, %c0_2] : memref<144x128xf32, #tpu.memory_space<vmem>>, vector<8x128xf32>
    %c8 = arith.constant 8 : index
    %c0_3 = arith.constant 0 : index
    %2 = vector.load %arg2[%c8, %c0_3] : memref<144x128xf32, #tpu.memory_space<vmem>>, vector<8x128xf32>
    %3 = vector.extract_strided_slice %2 {offsets = [0, 0], sizes = [1, 128], strides = [1, 1]} : vector<8x128xf32> to vector<1x128xf32>
    %4 = vector.extract_strided_slice %2 {offsets = [1, 0], sizes = [1, 128], strides = [1, 1]} : vector<8x128xf32> to vector<1x128xf32>
    %c16 = arith.constant 16 : index
    %c0_4 = arith.constant 0 : index
    %5 = vector.load %arg2[%c16, %c0_4] : memref<144x128xf32, #tpu.memory_space<vmem>>, vector<128x128xf32>
    %cst = arith.constant dense<0.000000e+00> : vector<128x128xf32>
    %6 = tpu.matmul %0, %1, %cst {dimension_numbers = #tpu.dot_dimension_numbers<[1], [0], [0], [1], [0, 0, 1, 1], [], []>, precision = #tpu.contract_precision<fp32>} : vector<128x8xf32>, vector<8x128xf32>, vector<128x128xf32> -> vector<128x128xf32>
    %7 = vector.broadcast %3 : vector<1x128xf32> to vector<128x128xf32>
    %8 = arith.addf %6, %7 : vector<128x128xf32>
    %cst_5 = arith.constant 0.00999999977 : f32
    %9 = vector.broadcast %cst_5 : f32 to vector<128x128xf32>
    %10 = arith.mulf %9, %8 : vector<128x128xf32>
    %11 = arith.maximumf %8, %10 : vector<128x128xf32>
    %cst_6 = arith.constant dense<0.000000e+00> : vector<128x128xf32>
    %12 = tpu.matmul %11, %5, %cst_6 {dimension_numbers = #tpu.dot_dimension_numbers<[1], [0], [0], [1], [0, 0, 1, 1], [], []>, precision = #tpu.contract_precision<fp32>} : vector<128x128xf32>, vector<128x128xf32>, vector<128x128xf32> -> vector<128x128xf32>
    %13 = vector.broadcast %4 : vector<1x128xf32> to vector<128x128xf32>
    %14 = arith.addf %12, %13 : vector<128x128xf32>
    %c0_7 = arith.constant 0 : index
    %c0_8 = arith.constant 0 : index
    %15 = vector.load %arg3[%c0_7, %c0_8] : memref<128x128xf32, #tpu.memory_space<vmem>>, vector<128x128xf32>
    tpu.vector_store %arg3[%c0_7, %c0_8], %14 {strides = array<i32>} : memref<128x128xf32, #tpu.memory_space<vmem>>, vector<128x128xf32>,
    return
  }
  func.func @transform_0(%arg0: i32) -> (i32, i32) {
    %c0_i32 = arith.constant 0 : i32
    %c0_i32_0 = arith.constant 0 : i32
    return %arg0, %c0_i32 : i32, i32
  }
  func.func @transform_1(%arg0: i32) -> (i32, i32) {
    %c0_i32 = arith.constant 0 : i32
    %c0_i32_0 = arith.constant 0 : i32
    %c0_i32_1 = arith.constant 0 : i32
    return %c0_i32, %c0_i32_0 : i32, i32
  }
  func.func @transform_2(%arg0: i32) -> (i32, i32) {
    %c0_i32 = arith.constant 0 : i32
    %c0_i32_0 = arith.constant 0 : i32
    return %arg0, %c0_i32 : i32, i32
  }
}

</mosaic_0001>

<llo_original>
// kernel: decoder_forward.1
$region0: #{decoder_forward.1}
  #allocation0 [shape = 'u32[]', space=smem, size = 0x4, offset = 0x4, fixed_abs, tag = 'smem constant byte address 0x4 - core index']
  #allocation1 [shape = 'u32[144,128]{1,0:T(1,128)}', space=vmem, size = 0x12000, scoped, tag = 'internal scratch']
  %s0 = inlined_call_operand.vmem [shape: f32[256,8], index: 0, kind: input, shape index: {}]
  %s1 = inlined_call_operand.vmem [shape: f32[144,128], index: 1, kind: input, shape index: {}]
  %s2 = inlined_call_operand.vmem [shape: f32[256,128], index: 2, kind: output, shape index: {}]
  %s3 = sld [smem:[#allocation0]]
  $region41: #{decoder_forward.1} parent=0
    _
  %s5 = ssub.s32 1, %s3
  %s6 = scalar_select 0, %s5, %s3
  loop: start=0, step=1, limit=4
  $region2: #{decoder_forward.1} parent=0 // loop_pre_header
    _
  $region3: #{decoder_forward.1} parent=0 // loop_header
    %s8 = sphi 0, %s12
    %p9 = scmp.ge.s32.totalorder %s8, 4
    %s18 = sphi 0, %s20
    %s21 = sphi 0, %s18
    %s22 = sphi 0, %s21
    %s38 = sphi 0, %s22
    %s42 = sphi 0, %s42
    %s44 = sphi 0, %s42
    %s45 = sphi 0, %s44
    %s59 = sphi 0, %s45
    %s65 = sphi 0, %s67
    %s68 = sphi 0, %s65
    %s69 = sphi 0, %s68
    %s85 = sphi 0, %s69
  $region4: #{decoder_forward.1} parent=0 // loop_header_branch
    %11 = sbr.rel (%p9) target = $region8
  $region5: #{decoder_forward.1} parent=0 // loop_body
    %s13 = ssub.s32 %s8, 1
    %s14 = ssub.s32 %s8, 2
    %s15 = sadd.s32 %s8, 1
    %s16 = ssub.s32 %s8, %s15
    %p17 = scmp.eq.s32.totalorder %s16, 0
    %s19 = sadd.s32 %s18, 1
    %s20 = scalar_select %p17, %s18, %s19
    %p23 = pneg %p17
    %p24 = scmp.eq.s32.totalorder %s8, 1
    %p25 = por %p23, %p24
    %p26 = scmp.ne.s32.totalorder %s18, %s21
    %p27 = scmp.eq.s32.totalorder %s8, 0
    %p28 = por %p26, %p27
    %p29 = scmp.ne.s32.totalorder %s18, %s21
    %p30 = scmp.eq.s32.totalorder %s13, 1
    %p31 = por %p29, %p30
    %p32 = scmp.ne.s32.totalorder %s21, %s22
    %p33 = scmp.eq.s32.totalorder %s13, 0
    %p34 = por %p32, %p33
    %p35 = scmp.ne.s32.totalorder %s21, %s22
    %p36 = scmp.eq.s32.totalorder %s14, 1
    %p37 = por %p35, %p36
    %p39 = scmp.ne.s32.totalorder %s22, %s38
    %p40 = scmp.eq.s32.totalorder %s14, 0
    %p41 = por %p39, %p40
    %s43 = sadd.s32 %s42, 1
    %p46 = scmp.eq.s32.totalorder %s8, 1
    %p47 = scmp.ne.s32.totalorder %s42, %s44
    %p48 = scmp.eq.s32.totalorder %s8, 0
    %p49 = por %p47, %p48
    %p50 = scmp.ne.s32.totalorder %s42, %s44
    %p51 = scmp.eq.s32.totalorder %s13, 1
    %p52 = por %p50, %p51
    %p53 = scmp.ne.s32.totalorder %s44, %s45
    %p54 = scmp.eq.s32.totalorder %s13, 0
    %p55 = por %p53, %p54
    %p56 = scmp.ne.s32.totalorder %s44, %s45
    %p57 = scmp.eq.s32.totalorder %s14, 1
    %p58 = por %p56, %p57
    %p60 = scmp.ne.s32.totalorder %s45, %s59
    %p61 = scmp.eq.s32.totalorder %s14, 0
    %p62 = por %p60, %p61
    %s63 = ssub.s32 %s8, %s15
    %p64 = scmp.eq.s32.totalorder %s63, 0
    %s66 = sadd.s32 %s65, 1
    %s67 = scalar_select %p64, %s65, %s66
    %p70 = pneg %p64
    %p71 = scmp.eq.s32.totalorder %s8, 1
    %p72 = por %p70, %p71
    %p73 = scmp.ne.s32.totalorder %s65, %s68
    %p74 = scmp.eq.s32.totalorder %s8, 0
    %p75 = por %p73, %p74
    %p76 = scmp.ne.s32.totalorder %s65, %s68
    %p77 = scmp.eq.s32.totalorder %s13, 1
    %p78 = por %p76, %p77
    %p79 = scmp.ne.s32.totalorder %s68, %s69
    %p80 = scmp.eq.s32.totalorder %s13, 0
    %p81 = por %p79, %p80
    %p82 = scmp.ne.s32.totalorder %s68, %s69
    %p83 = scmp.eq.s32.totalorder %s14, 1
    %p84 = por %p82, %p83
    %p86 = scmp.ne.s32.totalorder %s69, %s85
    %p87 = scmp.eq.s32.totalorder %s14, 0
    %p88 = por %p86, %p87
    %p89 = scmp.le.s32.totalorder 1, %s8
    %p90 = scmp.lt.s32.totalorder %s8, 3
    %p91 = pnand %p89, %p90
    %p92 = pneg %p91
    // Predicated region
    $region9: #{decoder_forward.1} parent=5 // pred_check
      _
    $region10: #{decoder_forward.1} parent=5 // pred_check_branch
      %94 = sbr.rel (%p91) target = $region12
    $region11: #{decoder_forward.1} parent=5 // pred_region
      %s95 = ssub.s32 %s8, 1
      // Predicated region
      $region13: #{decoder_forward.1} parent=11 // pred_check
        %p96 = pneg %p55
      $region14: #{decoder_forward.1} parent=11 // pred_check_branch
        %98 = sbr.rel (%p96) target = $region16
      $region15: #{decoder_forward.1} parent=11 // pred_region
        _
      $region16: #{decoder_forward.1} parent=11 // pred_fallthru
        _
    $region12: #{decoder_forward.1} parent=5 // pred_fallthru
      _
    %p99 = scmp.lt.s32.totalorder %s8, 2
    // Predicated region
    $region17: #{decoder_forward.1} parent=5 // pred_check
      %p100 = pneg %p99
    $region18: #{decoder_forward.1} parent=5 // pred_check_branch
      %102 = sbr.rel (%p100) target = $region20
    $region19: #{decoder_forward.1} parent=5 // pred_region
      // Predicated region
      $region21: #{decoder_forward.1} parent=19 // pred_check
        %p103 = pneg %p28
      $region22: #{decoder_forward.1} parent=19 // pred_check_branch
        %105 = sbr.rel (%p103) target = $region24
      $region23: #{decoder_forward.1} parent=19 // pred_region
        %s106 = smul.u32 16, %s8
        %p107 = scmp.lt.s32.totalorder %s106, 31
        %s108 = scalar_select %p107, %s106, 31
        %s109 = smul.addr %s108, 8
        %s110 = scalar_lea.vmem %s0, %s109
        %s111 = smul.u32 16, %s8
      $region24: #{decoder_forward.1} parent=19 // pred_fallthru
        _
    $region20: #{decoder_forward.1} parent=5 // pred_fallthru
      _
    %p112 = scmp.le.s32.totalorder 1, %s8
    %p113 = scmp.lt.s32.totalorder %s8, 3
    %p114 = pnand %p112, %p113
    %p115 = pneg %p114
    // Predicated region
    $region25: #{decoder_forward.1} parent=5 // pred_check
      _
    $region26: #{decoder_forward.1} parent=5 // pred_check_branch
      %117 = sbr.rel (%p114) target = $region28
    $region27: #{decoder_forward.1} parent=5 // pred_region
      %s118 = ssub.s32 %s8, 1
      %s119 = smul.u32 16, %s13
      %p120 = scmp.lt.s32.totalorder %s119, 31
      %s121 = scalar_select %p120, %s119, 31
      %s122 = smul.addr %s121, 8
      %s123 = scalar_lea.vmem %s0, %s122
      %p124 = pneg %p34
      %p125 = pneg %p31
      %p126 = pneg %p55
      %p127 = pneg %p52
      %p128 = pneg %p81
      %p129 = pneg %p78
      %s130 = smul.u32 16, %s13
      %p131 = scmp.lt.s32.totalorder %s130, 31
      %s132 = scalar_select %p131, %s130, 31
      %s133 = smul.addr %s132, 8
      %s134 = scalar_lea.vmem %s2, %s133
      %s135 = smul.u32 16, %s13
      %p136 = scmp.lt.s32.totalorder %s135, 31
      %s137 = scalar_select %p136, %s135, 31
      %s138 = smul.addr %s137, 8
      %s139 = scalar_lea.vmem %s0, %s138
      %s140 = smul.u32 16, %s13
      %s141 = smul.u32 16, %s13
      %p142 = scmp.lt.s32.totalorder %s141, 31
      %s143 = scalar_select %p142, %s141, 31
      %s144 = smul.addr %s143, 8
      %s145 = scalar_lea.vmem %s2, %s144
      %s146 = smul.u32 16, %s13
      %v147 = vld [vmem:[%s139] sm:$0xff]
      %v148 = vld [vmem:[%s139 + $0x8] sm:$0xff]
      %v149 = vld [vmem:[%s139 + $0x10] sm:$0xff]
      %v150 = vld [vmem:[%s139 + $0x18] sm:$0xff]
      %v151 = vld [vmem:[%s139 + $0x20] sm:$0xff]
      %v152 = vld [vmem:[%s139 + $0x28] sm:$0xff]
      %v153 = vld [vmem:[%s139 + $0x30] sm:$0xff]
      %v154 = vld [vmem:[%s139 + $0x38] sm:$0xff]
      %v155 = vld [vmem:[%s139 + $0x40] sm:$0xff]
      %v156 = vld [vmem:[%s139 + $0x48] sm:$0xff]
      %v157 = vld [vmem:[%s139 + $0x50] sm:$0xff]
      %v158 = vld [vmem:[%s139 + $0x58] sm:$0xff]
      %v159 = vld [vmem:[%s139 + $0x60] sm:$0xff]
      %v160 = vld [vmem:[%s139 + $0x68] sm:$0xff]
      %v161 = vld [vmem:[%s139 + $0x70] sm:$0xff]
      %v162 = vld [vmem:[%s139 + $0x78] sm:$0xff]
      %v163 = vld [vmem:[%s1] sm:$0xff]
      %v164 = vld [vmem:[%s1 + $0x8] sm:$0xff]
      %v165 = vld [vmem:[%s1 + $0x10] sm:$0xff]
      %v166 = vld [vmem:[%s1 + $0x18] sm:$0xff]
      %v167 = vld [vmem:[%s1 + $0x20] sm:$0xff]
      %v168 = vld [vmem:[%s1 + $0x28] sm:$0xff]
      %v169 = vld [vmem:[%s1 + $0x30] sm:$0xff]
      %v170 = vld [vmem:[%s1 + $0x38] sm:$0xff]
      %v171 = vld [vmem:[%s1 + $0x40] sm:$0xff]
      %v172 = vld [vmem:[%s1 + $0x48] sm:$0xff]
      %v173 = vld [vmem:[%s1 + $0x50] sm:$0xff]
      %v174 = vld [vmem:[%s1 + $0x58] sm:$0xff]
      %v175 = vld [vmem:[%s1 + $0x60] sm:$0xff]
      %v176 = vld [vmem:[%s1 + $0x68] sm:$0xff]
      %v177 = vld [vmem:[%s1 + $0x70] sm:$0xff]
      %v178 = vld [vmem:[%s1 + $0x78] sm:$0xff]
      %v179 = vld [vmem:[%s1 + $0x80] sm:$0xff]
      %v180 = vld [vmem:[%s1 + $0x88] sm:$0xff]
      %v181 = vlaneseq
      %v182 = vshrl.u32 %v181, 7
      %v183 = vsub.s32 0, %v182
      %v184 = vrot.slane %v164, %v183
      %vm185 = vcmask 64512
      %v187 = vsel %vm185, %v147, 0
      %v190 = vsel %vm185, %v148, 0
      %v193 = vsel %vm185, %v149, 0
      %v196 = vsel %vm185, %v150, 0
      %v199 = vsel %vm185, %v151, 0
      %v202 = vsel %vm185, %v152, 0
      %v205 = vsel %vm185, %v153, 0
      %v208 = vsel %vm185, %v154, 0
      %v211 = vsel %vm185, %v155, 0
      %v214 = vsel %vm185, %v156, 0
      %v217 = vsel %vm185, %v157, 0
      %v220 = vsel %vm185, %v158, 0
      %v223 = vsel %vm185, %v159, 0
      %v226 = vsel %vm185, %v160, 0
      %v229 = vsel %vm185, %v161, 0
      %v232 = vsel %vm185, %v162, 0
      %234 = vmatprep.subr.mxu0 0.0
      %235 = vmatpush1.msra.mxu0 0.0
      %236 = vmatprep.subr.mxu0 0.0
      %237 = vmatpush1.msra.mxu0 0.0
      %238 = vmatprep.subr.mxu0 0.0
      %239 = vmatpush1.msra.mxu0 0.0
      %240 = vmatprep.subr.mxu0 0.0
      %241 = vmatpush1.msra.mxu0 0.0
      %242 = vmatprep.subr.mxu0 0.0
      %243 = vmatpush1.msra.mxu0 0.0
      %244 = vmatprep.subr.mxu0 0.0
      %245 = vmatpush1.msra.mxu0 0.0
      %246 = vmatprep.subr.mxu0 0.0
      %247 = vmatpush1.msra.mxu0 0.0
      %248 = vmatprep.subr.mxu0 0.0
      %249 = vmatpush1.msra.mxu0 0.0
      %250 = vmatprep.subr.mxu0 0.0
      %251 = vmatpush1.msra.mxu0 0.0
      %252 = vmatprep.subr.mxu0 0.0
      %253 = vmatpush1.msra.mxu0 0.0
      %254 = vmatprep.subr.mxu0 0.0
      %255 = vmatpush1.msra.mxu0 0.0
      %256 = vmatprep.subr.mxu0 0.0
      %257 = vmatpush1.msra.mxu0 0.0
      %258 = vmatprep.subr.mxu0 0.0
      %259 = vmatpush1.msra.mxu0 0.0
      %260 = vmatprep.subr.mxu0 0.0
      %261 = vmatpush1.msra.mxu0 0.0
      %262 = vmatprep.subr.mxu0 0.0
      %263 = vmatpush1.msra.mxu0 0.0
      %264 = vmatprep.subr.mxu0 0.0
      %v265 = vand.u32 %v163, 4294901760
      %266 = vmatpush1.msra.mxu0 %v265
      %267 = vmatprep.subr.mxu0 0.0
      %268 = vmatpush2.msra.mxu0 0.0
      %269 = vmatprep.subr.mxu0 0.0
      %270 = vmatpush2.msra.mxu0 0.0
      %271 = vmatprep.subr.mxu0 0.0
      %272 = vmatpush2.msra.mxu0 0.0
      %273 = vmatprep.subr.mxu0 0.0
      %274 = vmatpush2.msra.mxu0 0.0
      %275 = vmatprep.subr.mxu0 0.0
      %276 = vmatpush2.msra.mxu0 0.0
      %277 = vmatprep.subr.mxu0 0.0
      %278 = vmatpush2.msra.mxu0 0.0
      %279 = vmatprep.subr.mxu0 0.0
      %280 = vmatpush2.msra.mxu0 0.0
      %281 = vmatprep.subr.mxu0 0.0
      %282 = vmatpush2.msra.mxu0 0.0
      %283 = vmatprep.subr.mxu0 0.0
      %284 = vmatpush2.msra.mxu0 0.0
      %285 = vmatprep.subr.mxu0 0.0
      %286 = vmatpush2.msra.mxu0 0.0
      %287 = vmatprep.subr.mxu0 0.0
      %288 = vmatpush2.msra.mxu0 0.0
      %289 = vmatprep.subr.mxu0 0.0
      %290 = vmatpush2.msra.mxu0 0.0
      %291 = vmatprep.subr.mxu0 0.0
      %292 = vmatpush2.msra.mxu0 0.0
      %293 = vmatprep.subr.mxu0 0.0
      %294 = vmatpush2.msra.mxu0 0.0
      %295 = vmatprep.subr.mxu0 0.0
      %296 = vmatpush2.msra.mxu0 0.0
      %297 = vmatprep.subr.mxu0 0.0
      %298 = vmatpush2.msra.mxu0 0.0
      %299 = vmatprep.mubr.f32.mxu0 0.0
      %v300 = vand.u32 %v187, 4294901760
      %v301 = vsub.f32 %v187, %v300
      %v302 = vand.u32 %v301, 4294901760
      %v303 = vsub.f32 %v301, %v302
      %v304 = vand.u32 %v303, 4294901760
      %305 = vmatmul.mubr.f32.gmra.mxu0 %v304
      %v306 = vpop.f32.mrf.mxu0
      %v307 = vadd.f32 %v184, %v306
      %v308 = vpop.f32.mrf.mxu0
      %309 = vmatprep.mubr.f32.mxu0 0.0
      %v310 = vand.u32 %v190, 4294901760
      %v311 = vsub.f32 %v190, %v310
      %v312 = vand.u32 %v311, 4294901760
      %v313 = vsub.f32 %v311, %v312
      %v314 = vand.u32 %v313, 4294901760
      %315 = vmatmul.mubr.f32.gmra.mxu0 %v314
      %v316 = vpop.f32.mrf.mxu0
      %v317 = vadd.f32 %v184, %v316
      %v318 = vpop.f32.mrf.mxu0
      %319 = vmatprep.mubr.f32.mxu0 0.0
      %v320 = vand.u32 %v193, 4294901760
      %v321 = vsub.f32 %v193, %v320
      %v322 = vand.u32 %v321, 4294901760
      %v323 = vsub.f32 %v321, %v322
      %v324 = vand.u32 %v323, 4294901760
      %325 = vmatmul.mubr.f32.gmra.mxu0 %v324
      %v326 = vpop.f32.mrf.mxu0
      %v327 = vadd.f32 %v184, %v326
      %v328 = vpop.f32.mrf.mxu0
      %329 = vmatprep.mubr.f32.mxu0 0.0
      %v330 = vand.u32 %v196, 4294901760
      %v331 = vsub.f32 %v196, %v330
      %v332 = vand.u32 %v331, 4294901760
      %v333 = vsub.f32 %v331, %v332
      %v334 = vand.u32 %v333, 4294901760
      %335 = vmatmul.mubr.f32.gmra.mxu0 %v334
      %v336 = vpop.f32.mrf.mxu0
      %v337 = vadd.f32 %v184, %v336
      %v338 = vpop.f32.mrf.mxu0
      %339 = vmatprep.mubr.f32.mxu0 0.0
      %v340 = vand.u32 %v199, 4294901760
      %v341 = vsub.f32 %v199, %v340
      %v342 = vand.u32 %v341, 4294901760
      %v343 = vsub.f32 %v341, %v342
      %v344 = vand.u32 %v343, 4294901760
      %345 = vmatmul.mubr.f32.gmra.mxu0 %v344
      %v346 = vpop.f32.mrf.mxu0
      %v347 = vadd.f32 %v184, %v346
      %v348 = vpop.f32.mrf.mxu0
      %349 = vmatprep.mubr.f32.mxu0 0.0
      %v350 = vand.u32 %v202, 4294901760
      %v351 = vsub.f32 %v202, %v350
      %v352 = vand.u32 %v351, 4294901760
      %v353 = vsub.f32 %v351, %v352
      %v354 = vand.u32 %v353, 4294901760
      %355 = vmatmul.mubr.f32.gmra.mxu0 %v354
      %v356 = vpop.f32.mrf.mxu0
      %v357 = vadd.f32 %v184, %v356
      %v358 = vpop.f32.mrf.mxu0
      %359 = vmatprep.mubr.f32.mxu0 0.0
      %v360 = vand.u32 %v205, 4294901760
      %v361 = vsub.f32 %v205, %v360
      %v362 = vand.u32 %v361, 4294901760
      %v363 = vsub.f32 %v361, %v362
      %v364 = vand.u32 %v363, 4294901760
      %365 = vmatmul.mubr.f32.gmra.mxu0 %v364
      %v366 = vpop.f32.mrf.mxu0
      %v367 = vadd.f32 %v184, %v366
      %v368 = vpop.f32.mrf.mxu0
      %369 = vmatprep.mubr.f32.mxu0 0.0
      %v370 = vand.u32 %v208, 4294901760
      %v371 = vsub.f32 %v208, %v370
      %v372 = vand.u32 %v371, 4294901760
      %v373 = vsub.f32 %v371, %v372
      %v374 = vand.u32 %v373, 4294901760
      %375 = vmatmul.mubr.f32.gmra.mxu0 %v374
      %v376 = vpop.f32.mrf.mxu0
      %v377 = vadd.f32 %v184, %v376
      %v378 = vpop.f32.mrf.mxu0
      %379 = vmatprep.mubr.f32.mxu0 0.0
      %v380 = vand.u32 %v211, 4294901760
      %v381 = vsub.f32 %v211, %v380
      %v382 = vand.u32 %v381, 4294901760
      %v383 = vsub.f32 %v381, %v382
      %v384 = vand.u32 %v383, 4294901760
      %385 = vmatmul.mubr.f32.gmra.mxu0 %v384
      %v386 = vpop.f32.mrf.mxu0
      %v387 = vadd.f32 %v184, %v386
      %v388 = vpop.f32.mrf.mxu0
      %389 = vmatprep.mubr.f32.mxu0 0.0
      %v390 = vand.u32 %v214, 4294901760
      %v391 = vsub.f32 %v214, %v390
      %v392 = vand.u32 %v391, 4294901760
      %v393 = vsub.f32 %v391, %v392
      %v394 = vand.u32 %v393, 4294901760
      %395 = vmatmul.mubr.f32.gmra.mxu0 %v394
      %v396 = vpop.f32.mrf.mxu0
      %v397 = vadd.f32 %v184, %v396
      %v398 = vpop.f32.mrf.mxu0
      %399 = vmatprep.mubr.f32.mxu0 0.0
      %v400 = vand.u32 %v217, 4294901760
      %v401 = vsub.f32 %v217, %v400
      %v402 = vand.u32 %v401, 4294901760
      %v403 = vsub.f32 %v401, %v402
      %v404 = vand.u32 %v403, 4294901760
      %405 = vmatmul.mubr.f32.gmra.mxu0 %v404
      %v406 = vpop.f32.mrf.mxu0
      %v407 = vadd.f32 %v184, %v406
      %v408 = vpop.f32.mrf.mxu0
      %409 = vmatprep.mubr.f32.mxu0 0.0
      %v410 = vand.u32 %v220, 4294901760
      %v411 = vsub.f32 %v220, %v410
      %v412 = vand.u32 %v411, 4294901760
      %v413 = vsub.f32 %v411, %v412
      %v414 = vand.u32 %v413, 4294901760
      %415 = vmatmul.mubr.f32.gmra.mxu0 %v414
      %v416 = vpop.f32.mrf.mxu0
      %v417 = vadd.f32 %v184, %v416
      %v418 = vpop.f32.mrf.mxu0
      %419 = vmatprep.mubr.f32.mxu0 0.0
      %v420 = vand.u32 %v223, 4294901760
      %v421 = vsub.f32 %v223, %v420
      %v422 = vand.u32 %v421, 4294901760
      %v423 = vsub.f32 %v421, %v422
      %v424 = vand.u32 %v423, 4294901760
      %425 = vmatmul.mubr.f32.gmra.mxu0 %v424
      %v426 = vpop.f32.mrf.mxu0
      %v427 = vadd.f32 %v184, %v426
      %v428 = vpop.f32.mrf.mxu0
      %429 = vmatprep.mubr.f32.mxu0 0.0
      %v430 = vand.u32 %v226, 4294901760
      %v431 = vsub.f32 %v226, %v430
      %v432 = vand.u32 %v431, 4294901760
      %v433 = vsub.f32 %v431, %v432
      %v434 = vand.u32 %v433, 4294901760
      %435 = vmatmul.mubr.f32.gmra.mxu0 %v434
      %v436 = vpop.f32.mrf.mxu0
      %v437 = vadd.f32 %v184, %v436
      %v438 = vpop.f32.mrf.mxu0
      %439 = vmatprep.mubr.f32.mxu0 0.0
      %v440 = vand.u32 %v229, 4294901760
      %v441 = vsub.f32 %v229, %v440
      %v442 = vand.u32 %v441, 4294901760
      %v443 = vsub.f32 %v441, %v442
      %v444 = vand.u32 %v443, 4294901760
      %445 = vmatmul.mubr.f32.gmra.mxu0 %v444
      %v446 = vpop.f32.mrf.mxu0
      %v447 = vadd.f32 %v184, %v446
      %v448 = vpop.f32.mrf.mxu0
      %449 = vmatprep.mubr.f32.mxu0 0.0
      %v450 = vand.u32 %v232, 4294901760
      %v451 = vsub.f32 %v232, %v450
      %v452 = vand.u32 %v451, 4294901760
      %v453 = vsub.f32 %v451, %v452
      %v454 = vand.u32 %v453, 4294901760
      %455 = vmatmul.mubr.f32.gmra.mxu0 %v454
      %v456 = vpop.f32.mrf.mxu0
      %v457 = vadd.f32 %v184, %v456
      %v458 = vpop.f32.mrf.mxu0
      %459 = vdwg.mxu0
      %460 = vmatprep.subr.mxu0 0.0
      %461 = vmatpush1.msra.mxu0 0.0
      %462 = vmatprep.subr.mxu0 0.0
      %463 = vmatpush1.msra.mxu0 0.0
      %464 = vmatprep.subr.mxu0 0.0
      %465 = vmatpush1.msra.mxu0 0.0
      %466 = vmatprep.subr.mxu0 0.0
      %467 = vmatpush1.msra.mxu0 0.0
      %468 = vmatprep.subr.mxu0 0.0
      %469 = vmatpush1.msra.mxu0 0.0
      %470 = vmatprep.subr.mxu0 0.0
      %471 = vmatpush1.msra.mxu0 0.0
      %472 = vmatprep.subr.mxu0 0.0
      %473 = vmatpush1.msra.mxu0 0.0
      %474 = vmatprep.subr.mxu0 0.0
      %475 = vmatpush1.msra.mxu0 0.0
      %476 = vmatprep.subr.mxu0 0.0
      %477 = vmatpush1.msra.mxu0 0.0
      %478 = vmatprep.subr.mxu0 0.0
      %479 = vmatpush1.msra.mxu0 0.0
      %480 = vmatprep.subr.mxu0 0.0
      %481 = vmatpush1.msra.mxu0 0.0
      %482 = vmatprep.subr.mxu0 0.0
      %483 = vmatpush1.msra.mxu0 0.0
      %484 = vmatprep.subr.mxu0 0.0
      %485 = vmatpush1.msra.mxu0 0.0
      %486 = vmatprep.subr.mxu0 0.0
      %487 = vmatpush1.msra.mxu0 0.0
      %488 = vmatprep.subr.mxu0 0.0
      %489 = vmatpush1.msra.mxu0 0.0
      %490 = vmatprep.subr.mxu0 0.0
      %v491 = vand.u32 %v163, 4294901760
      %v492 = vsub.f32 %v163, %v491
      %v493 = vand.u32 %v492, 4294901760
      %v494 = vsub.f32 %v492, %v493
      %v495 = vand.u32 %v494, 4294901760
      %496 = vmatpush1.msra.mxu0 %v495
      %497 = vmatprep.subr.mxu0 0.0
      %498 = vmatpush2.msra.mxu0 0.0
      %499 = vmatprep.subr.mxu0 0.0
      %500 = vmatpush2.msra.mxu0 0.0
      %501 = vmatprep.subr.mxu0 0.0
      %502 = vmatpush2.msra.mxu0 0.0
      %503 = vmatprep.subr.mxu0 0.0
      %504 = vmatpush2.msra.mxu0 0.0
      %505 = vmatprep.subr.mxu0 0.0
      %506 = vmatpush2.msra.mxu0 0.0
      %507 = vmatprep.subr.mxu0 0.0
      %508 = vmatpush2.msra.mxu0 0.0
      %509 = vmatprep.subr.mxu0 0.0
      %510 = vmatpush2.msra.mxu0 0.0
      %511 = vmatprep.subr.mxu0 0.0
      %512 = vmatpush2.msra.mxu0 0.0
      %513 = vmatprep.subr.mxu0 0.0
      %514 = vmatpush2.msra.mxu0 0.0
      %515 = vmatprep.subr.mxu0 0.0
      %516 = vmatpush2.msra.mxu0 0.0
      %517 = vmatprep.subr.mxu0 0.0
      %518 = vmatpush2.msra.mxu0 0.0
      %519 = vmatprep.subr.mxu0 0.0
      %520 = vmatpush2.msra.mxu0 0.0
      %521 = vmatprep.subr.mxu0 0.0
      %522 = vmatpush2.msra.mxu0 0.0
      %523 = vmatprep.subr.mxu0 0.0
      %524 = vmatpush2.msra.mxu0 0.0
      %525 = vmatprep.subr.mxu0 0.0
      %526 = vmatpush2.msra.mxu0 0.0
      %527 = vmatprep.subr.mxu0 0.0
      %528 = vmatpush2.msra.mxu0 0.0
      %529 = vmatprep.mubr.f32.mxu0 0.0
      %v530 = vand.u32 %v187, 4294901760
      %531 = vmatmul.mubr.f32.gmra.mxu0 %v530
      %v532 = vpop.f32.mrf.mxu0
      %v533 = vadd.f32 %v307, %v532
      %v534 = vpop.f32.mrf.mxu0
      %535 = vmatprep.mubr.f32.mxu0 0.0
      %v536 = vand.u32 %v190, 4294901760
      %537 = vmatmul.mubr.f32.gmra.mxu0 %v536
      %v538 = vpop.f32.mrf.mxu0
      %v539 = vadd.f32 %v317, %v538
      %v540 = vpop.f32.mrf.mxu0
      %541 = vmatprep.mubr.f32.mxu0 0.0
      %v542 = vand.u32 %v193, 4294901760
      %543 = vmatmul.mubr.f32.gmra.mxu0 %v542
      %v544 = vpop.f32.mrf.mxu0
      %v545 = vadd.f32 %v327, %v544
      %v546 = vpop.f32.mrf.mxu0
      %547 = vmatprep.mubr.f32.mxu0 0.0
      %v548 = vand.u32 %v196, 4294901760
      %549 = vmatmul.mubr.f32.gmra.mxu0 %v548
      %v550 = vpop.f32.mrf.mxu0
      %v551 = vadd.f32 %v337, %v550
      %v552 = vpop.f32.mrf.mxu0
      %553 = vmatprep.mubr.f32.mxu0 0.0
      %v554 = vand.u32 %v199, 4294901760
      %555 = vmatmul.mubr.f32.gmra.mxu0 %v554
      %v556 = vpop.f32.mrf.mxu0
      %v557 = vadd.f32 %v347, %v556
      %v558 = vpop.f32.mrf.mxu0
      %559 = vmatprep.mubr.f32.mxu0 0.0
      %v560 = vand.u32 %v202, 4294901760
      %561 = vmatmul.mubr.f32.gmra.mxu0 %v560
      %v562 = vpop.f32.mrf.mxu0
      %v563 = vadd.f32 %v357, %v562
      %v564 = vpop.f32.mrf.mxu0
      %565 = vmatprep.mubr.f32.mxu0 0.0
      %v566 = vand.u32 %v205, 4294901760
      %567 = vmatmul.mubr.f32.gmra.mxu0 %v566
      %v568 = vpop.f32.mrf.mxu0
      %v569 = vadd.f32 %v367, %v568
      %v570 = vpop.f32.mrf.mxu0
      %571 = vmatprep.mubr.f32.mxu0 0.0
      %v572 = vand.u32 %v208, 4294901760
      %573 = vmatmul.mubr.f32.gmra.mxu0 %v572
      %v574 = vpop.f32.mrf.mxu0
      %v575 = vadd.f32 %v377, %v574
      %v576 = vpop.f32.mrf.mxu0
      %577 = vmatprep.mubr.f32.mxu0 0.0
      %v578 = vand.u32 %v211, 4294901760
      %579 = vmatmul.mubr.f32.gmra.mxu0 %v578
      %v580 = vpop.f32.mrf.mxu0
      %v581 = vadd.f32 %v387, %v580
      %v582 = vpop.f32.mrf.mxu0
      %583 = vmatprep.mubr.f32.mxu0 0.0
      %v584 = vand.u32 %v214, 4294901760
      %585 = vmatmul.mubr.f32.gmra.mxu0 %v584
      %v586 = vpop.f32.mrf.mxu0
      %v587 = vadd.f32 %v397, %v586
      %v588 = vpop.f32.mrf.mxu0
      %589 = vmatprep.mubr.f32.mxu0 0.0
      %v590 = vand.u32 %v217, 4294901760
      %591 = vmatmul.mubr.f32.gmra.mxu0 %v590
      %v592 = vpop.f32.mrf.mxu0
      %v593 = vadd.f32 %v407, %v592
      %v594 = vpop.f32.mrf.mxu0
      %595 = vmatprep.mubr.f32.mxu0 0.0
      %v596 = vand.u32 %v220, 4294901760
      %597 = vmatmul.mubr.f32.gmra.mxu0 %v596
      %v598 = vpop.f32.mrf.mxu0
      %v599 = vadd.f32 %v417, %v598
      %v600 = vpop.f32.mrf.mxu0
      %601 = vmatprep.mubr.f32.mxu0 0.0
      %v602 = vand.u32 %v223, 4294901760
      %603 = vmatmul.mubr.f32.gmra.mxu0 %v602
      %v604 = vpop.f32.mrf.mxu0
      %v605 = vadd.f32 %v427, %v604
      %v606 = vpop.f32.mrf.mxu0
      %607 = vmatprep.mubr.f32.mxu0 0.0
      %v608 = vand.u32 %v226, 4294901760
      %609 = vmatmul.mubr.f32.gmra.mxu0 %v608
      %v610 = vpop.f32.mrf.mxu0
      %v611 = vadd.f32 %v437, %v610
      %v612 = vpop.f32.mrf.mxu0
      %613 = vmatprep.mubr.f32.mxu0 0.0
      %v614 = vand.u32 %v229, 4294901760
      %615 = vmatmul.mubr.f32.gmra.mxu0 %v614
      %v616 = vpop.f32.mrf.mxu0
      %v617 = vadd.f32 %v447, %v616
      %v618 = vpop.f32.mrf.mxu0
      %619 = vmatprep.mubr.f32.mxu0 0.0
      %v620 = vand.u32 %v232, 4294901760
      %621 = vmatmul.mubr.f32.gmra.mxu0 %v620
      %v622 = vpop.f32.mrf.mxu0
      %v623 = vadd.f32 %v457, %v622
      %v624 = vpop.f32.mrf.mxu0
      %625 = vdwg.mxu0
      %626 = vmatprep.subr.mxu0 0.0
      %627 = vmatpush1.msra.mxu0 0.0
      %628 = vmatprep.subr.mxu0 0.0
      %629 = vmatpush1.msra.mxu0 0.0
      %630 = vmatprep.subr.mxu0 0.0
      %631 = vmatpush1.msra.mxu0 0.0
      %632 = vmatprep.subr.mxu0 0.0
      %633 = vmatpush1.msra.mxu0 0.0
      %634 = vmatprep.subr.mxu0 0.0
      %635 = vmatpush1.msra.mxu0 0.0
      %636 = vmatprep.subr.mxu0 0.0
      %637 = vmatpush1.msra.mxu0 0.0
      %638 = vmatprep.subr.mxu0 0.0
      %639 = vmatpush1.msra.mxu0 0.0
      %640 = vmatprep.subr.mxu0 0.0
      %641 = vmatpush1.msra.mxu0 0.0
      %642 = vmatprep.subr.mxu0 0.0
      %643 = vmatpush1.msra.mxu0 0.0
      %644 = vmatprep.subr.mxu0 0.0
      %645 = vmatpush1.msra.mxu0 0.0
      %646 = vmatprep.subr.mxu0 0.0
      %647 = vmatpush1.msra.mxu0 0.0
      %648 = vmatprep.subr.mxu0 0.0
      %649 = vmatpush1.msra.mxu0 0.0
      %650 = vmatprep.subr.mxu0 0.0
      %651 = vmatpush1.msra.mxu0 0.0
      %652 = vmatprep.subr.mxu0 0.0
      %653 = vmatpush1.msra.mxu0 0.0
      %654 = vmatprep.subr.mxu0 0.0
      %655 = vmatpush1.msra.mxu0 0.0
      %656 = vmatprep.subr.mxu0 0.0
      %v657 = vand.u32 %v163, 4294901760
      %v658 = vsub.f32 %v163, %v657
      %659 = vmatpush1.msra.mxu0 %v658
      %660 = vmatprep.subr.mxu0 0.0
      %661 = vmatpush2.msra.mxu0 0.0
      %662 = vmatprep.subr.mxu0 0.0
      %663 = vmatpush2.msra.mxu0 0.0
      %664 = vmatprep.subr.mxu0 0.0
      %665 = vmatpush2.msra.mxu0 0.0
      %666 = vmatprep.subr.mxu0 0.0
      %667 = vmatpush2.msra.mxu0 0.0
      %668 = vmatprep.subr.mxu0 0.0
      %669 = vmatpush2.msra.mxu0 0.0
      %670 = vmatprep.subr.mxu0 0.0
      %671 = vmatpush2.msra.mxu0 0.0
      %672 = vmatprep.subr.mxu0 0.0
      %673 = vmatpush2.msra.mxu0 0.0
      %674 = vmatprep.subr.mxu0 0.0
      %675 = vmatpush2.msra.mxu0 0.0
      %676 = vmatprep.subr.mxu0 0.0
      %677 = vmatpush2.msra.mxu0 0.0
      %678 = vmatprep.subr.mxu0 0.0
      %679 = vmatpush2.msra.mxu0 0.0
      %680 = vmatprep.subr.mxu0 0.0
      %681 = vmatpush2.msra.mxu0 0.0
      %682 = vmatprep.subr.mxu0 0.0
      %683 = vmatpush2.msra.mxu0 0.0
      %684 = vmatprep.subr.mxu0 0.0
      %685 = vmatpush2.msra.mxu0 0.0
      %686 = vmatprep.subr.mxu0 0.0
      %687 = vmatpush2.msra.mxu0 0.0
      %688 = vmatprep.subr.mxu0 0.0
      %689 = vmatpush2.msra.mxu0 0.0
      %690 = vmatprep.subr.mxu0 0.0
      %691 = vmatpush2.msra.mxu0 0.0
      %692 = vmatprep.mubr.f32.mxu0 0.0
      %v693 = vand.u32 %v187, 4294901760
      %v694 = vsub.f32 %v187, %v693
      %695 = vmatmul.mubr.f32.gmra.mxu0 %v694
      %v696 = vpop.f32.mrf.mxu0
      %v697 = vadd.f32 %v533, %v696
      %v698 = vpop.f32.mrf.mxu0
      %699 = vmatprep.mubr.f32.mxu0 0.0
      %v700 = vand.u32 %v190, 4294901760
      %v701 = vsub.f32 %v190, %v700
      %702 = vmatmul.mubr.f32.gmra.mxu0 %v701
      %v703 = vpop.f32.mrf.mxu0
      %v704 = vadd.f32 %v539, %v703
      %v705 = vpop.f32.mrf.mxu0
      %706 = vmatprep.mubr.f32.mxu0 0.0
      %v707 = vand.u32 %v193, 4294901760
      %v708 = vsub.f32 %v193, %v707
      %709 = vmatmul.mubr.f32.gmra.mxu0 %v708
      %v710 = vpop.f32.mrf.mxu0
      %v711 = vadd.f32 %v545, %v710
      %v712 = vpop.f32.mrf.mxu0
      %713 = vmatprep.mubr.f32.mxu0 0.0
      %v714 = vand.u32 %v196, 4294901760
      %v715 = vsub.f32 %v196, %v714
      %716 = vmatmul.mubr.f32.gmra.mxu0 %v715
      %v717 = vpop.f32.mrf.mxu0
      %v718 = vadd.f32 %v551, %v717
      %v719 = vpop.f32.mrf.mxu0
      %720 = vmatprep.mubr.f32.mxu0 0.0
      %v721 = vand.u32 %v199, 4294901760
      %v722 = vsub.f32 %v199, %v721
      %723 = vmatmul.mubr.f32.gmra.mxu0 %v722
      %v724 = vpop.f32.mrf.mxu0
      %v725 = vadd.f32 %v557, %v724
      %v726 = vpop.f32.mrf.mxu0
      %727 = vmatprep.mubr.f32.mxu0 0.0
      %v728 = vand.u32 %v202, 4294901760
      %v729 = vsub.f32 %v202, %v728
      %730 = vmatmul.mubr.f32.gmra.mxu0 %v729
      %v731 = vpop.f32.mrf.mxu0
      %v732 = vadd.f32 %v563, %v731
      %v733 = vpop.f32.mrf.mxu0
      %734 = vmatprep.mubr.f32.mxu0 0.0
      %v735 = vand.u32 %v205, 4294901760
      %v736 = vsub.f32 %v205, %v735
      %737 = vmatmul.mubr.f32.gmra.mxu0 %v736
      %v738 = vpop.f32.mrf.mxu0
      %v739 = vadd.f32 %v569, %v738
      %v740 = vpop.f32.mrf.mxu0
      %741 = vmatprep.mubr.f32.mxu0 0.0
      %v742 = vand.u32 %v208, 4294901760
      %v743 = vsub.f32 %v208, %v742
      %744 = vmatmul.mubr.f32.gmra.mxu0 %v743
      %v745 = vpop.f32.mrf.mxu0
      %v746 = vadd.f32 %v575, %v745
      %v747 = vpop.f32.mrf.mxu0
      %748 = vmatprep.mubr.f32.mxu0 0.0
      %v749 = vand.u32 %v211, 4294901760
      %v750 = vsub.f32 %v211, %v749
      %751 = vmatmul.mubr.f32.gmra.mxu0 %v750
      %v752 = vpop.f32.mrf.mxu0
      %v753 = vadd.f32 %v581, %v752
      %v754 = vpop.f32.mrf.mxu0
      %755 = vmatprep.mubr.f32.mxu0 0.0
      %v756 = vand.u32 %v214, 4294901760
      %v757 = vsub.f32 %v214, %v756
      %758 = vmatmul.mubr.f32.gmra.mxu0 %v757
      %v759 = vpop.f32.mrf.mxu0
      %v760 = vadd.f32 %v587, %v759
      %v761 = vpop.f32.mrf.mxu0
      %762 = vmatprep.mubr.f32.mxu0 0.0
      %v763 = vand.u32 %v217, 4294901760
      %v764 = vsub.f32 %v217, %v763
      %765 = vmatmul.mubr.f32.gmra.mxu0 %v764
      %v766 = vpop.f32.mrf.mxu0
      %v767 = vadd.f32 %v593, %v766
      %v768 = vpop.f32.mrf.mxu0
      %769 = vmatprep.mubr.f32.mxu0 0.0
      %v770 = vand.u32 %v220, 4294901760
      %v771 = vsub.f32 %v220, %v770
      %772 = vmatmul.mubr.f32.gmra.mxu0 %v771
      %v773 = vpop.f32.mrf.mxu0
      %v774 = vadd.f32 %v599, %v773
      %v775 = vpop.f32.mrf.mxu0
      %776 = vmatprep.mubr.f32.mxu0 0.0
      %v777 = vand.u32 %v223, 4294901760
      %v778 = vsub.f32 %v223, %v777
      %779 = vmatmul.mubr.f32.gmra.mxu0 %v778
      %v780 = vpop.f32.mrf.mxu0
      %v781 = vadd.f32 %v605, %v780
      %v782 = vpop.f32.mrf.mxu0
      %783 = vmatprep.mubr.f32.mxu0 0.0
      %v784 = vand.u32 %v226, 4294901760
      %v785 = vsub.f32 %v226, %v784
      %786 = vmatmul.mubr.f32.gmra.mxu0 %v785
      %v787 = vpop.f32.mrf.mxu0
      %v788 = vadd.f32 %v611, %v787
      %v789 = vpop.f32.mrf.mxu0
      %790 = vmatprep.mubr.f32.mxu0 0.0
      %v791 = vand.u32 %v229, 4294901760
      %v792 = vsub.f32 %v229, %v791
      %793 = vmatmul.mubr.f32.gmra.mxu0 %v792
      %v794 = vpop.f32.mrf.mxu0
      %v795 = vadd.f32 %v617, %v794
      %v796 = vpop.f32.mrf.mxu0
      %797 = vmatprep.mubr.f32.mxu0 0.0
      %v798 = vand.u32 %v232, 4294901760
      %v799 = vsub.f32 %v232, %v798
      %800 = vmatmul.mubr.f32.gmra.mxu0 %v799
      %v801 = vpop.f32.mrf.mxu0
      %v802 = vadd.f32 %v623, %v801
      %v803 = vpop.f32.mrf.mxu0
      %804 = vdwg.mxu0
      %805 = vmatprep.subr.mxu0 0.0
      %806 = vmatpush1.msra.mxu0 0.0
      %807 = vmatprep.subr.mxu0 0.0
      %808 = vmatpush1.msra.mxu0 0.0
      %809 = vmatprep.subr.mxu0 0.0
      %810 = vmatpush1.msra.mxu0 0.0
      %811 = vmatprep.subr.mxu0 0.0
      %812 = vmatpush1.msra.mxu0 0.0
      %813 = vmatprep.subr.mxu0 0.0
      %814 = vmatpush1.msra.mxu0 0.0
      %815 = vmatprep.subr.mxu0 0.0
      %816 = vmatpush1.msra.mxu0 0.0
      %817 = vmatprep.subr.mxu0 0.0
      %818 = vmatpush1.msra.mxu0 0.0
      %819 = vmatprep.subr.mxu0 0.0
      %820 = vmatpush1.msra.mxu0 0.0
      %821 = vmatprep.subr.mxu0 0.0
      %822 = vmatpush1.msra.mxu0 0.0
      %823 = vmatprep.subr.mxu0 0.0
      %824 = vmatpush1.msra.mxu0 0.0
      %825 = vmatprep.subr.mxu0 0.0
      %826 = vmatpush1.msra.mxu0 0.0
      %827 = vmatprep.subr.mxu0 0.0
      %828 = vmatpush1.msra.mxu0 0.0
      %829 = vmatprep.subr.mxu0 0.0
      %830 = vmatpush1.msra.mxu0 0.0
      %831 = vmatprep.subr.mxu0 0.0
      %832 = vmatpush1.msra.mxu0 0.0
      %833 = vmatprep.subr.mxu0 0.0
      %834 = vmatpush1.msra.mxu0 0.0
      %835 = vmatprep.subr.mxu0 0.0
      %v836 = vand.u32 %v163, 4294901760
      %837 = vmatpush1.msra.mxu0 %v836
      %838 = vmatprep.subr.mxu0 0.0
      %839 = vmatpush2.msra.mxu0 0.0
      %840 = vmatprep.subr.mxu0 0.0
      %841 = vmatpush2.msra.mxu0 0.0
      %842 = vmatprep.subr.mxu0 0.0
      %843 = vmatpush2.msra.mxu0 0.0
      %844 = vmatprep.subr.mxu0 0.0
      %845 = vmatpush2.msra.mxu0 0.0
      %846 = vmatprep.subr.mxu0 0.0
      %847 = vmatpush2.msra.mxu0 0.0
      %848 = vmatprep.subr.mxu0 0.0
      %849 = vmatpush2.msra.mxu0 0.0
      %850 = vmatprep.subr.mxu0 0.0
      %851 = vmatpush2.msra.mxu0 0.0
      %852 = vmatprep.subr.mxu0 0.0
      %853 = vmatpush2.msra.mxu0 0.0
      %854 = vmatprep.subr.mxu0 0.0
      %855 = vmatpush2.msra.mxu0 0.0
      %856 = vmatprep.subr.mxu0 0.0
      %857 = vmatpush2.msra.mxu0 0.0
      %858 = vmatprep.subr.mxu0 0.0
      %859 = vmatpush2.msra.mxu0 0.0
      %860 = vmatprep.subr.mxu0 0.0
      %861 = vmatpush2.msra.mxu0 0.0
      %862 = vmatprep.subr.mxu0 0.0
      %863 = vmatpush2.msra.mxu0 0.0
      %864 = vmatprep.subr.mxu0 0.0
      %865 = vmatpush2.msra.mxu0 0.0
      %866 = vmatprep.subr.mxu0 0.0
      %867 = vmatpush2.msra.mxu0 0.0
      %868 = vmatprep.subr.mxu0 0.0
      %869 = vmatpush2.msra.mxu0 0.0
      %870 = vmatprep.mubr.f32.mxu0 0.0
      %v871 = vand.u32 %v187, 4294901760
      %v872 = vsub.f32 %v187, %v871
      %v873 = vand.u32 %v872, 4294901760
      %874 = vmatmul.mubr.f32.gmra.mxu0 %v873
      %v875 = vpop.f32.mrf.mxu0
      %v876 = vadd.f32 %v697, %v875
      %v877 = vpop.f32.mrf.mxu0
      %878 = vmatprep.mubr.f32.mxu0 0.0
      %v879 = vand.u32 %v190, 4294901760
      %v880 = vsub.f32 %v190, %v879
      %v881 = vand.u32 %v880, 4294901760
      %882 = vmatmul.mubr.f32.gmra.mxu0 %v881
      %v883 = vpop.f32.mrf.mxu0
      %v884 = vadd.f32 %v704, %v883
      %v885 = vpop.f32.mrf.mxu0
      %886 = vmatprep.mubr.f32.mxu0 0.0
      %v887 = vand.u32 %v193, 4294901760
      %v888 = vsub.f32 %v193, %v887
      %v889 = vand.u32 %v888, 4294901760
      %890 = vmatmul.mubr.f32.gmra.mxu0 %v889
      %v891 = vpop.f32.mrf.mxu0
      %v892 = vadd.f32 %v711, %v891
      %v893 = vpop.f32.mrf.mxu0
      %894 = vmatprep.mubr.f32.mxu0 0.0
      %v895 = vand.u32 %v196, 4294901760
      %v896 = vsub.f32 %v196, %v895
      %v897 = vand.u32 %v896, 4294901760
      %898 = vmatmul.mubr.f32.gmra.mxu0 %v897
      %v899 = vpop.f32.mrf.mxu0
      %v900 = vadd.f32 %v718, %v899
      %v901 = vpop.f32.mrf.mxu0
      %902 = vmatprep.mubr.f32.mxu0 0.0
      %v903 = vand.u32 %v199, 4294901760
      %v904 = vsub.f32 %v199, %v903
      %v905 = vand.u32 %v904, 4294901760
      %906 = vmatmul.mubr.f32.gmra.mxu0 %v905
      %v907 = vpop.f32.mrf.mxu0
      %v908 = vadd.f32 %v725, %v907
      %v909 = vpop.f32.mrf.mxu0
      %910 = vmatprep.mubr.f32.mxu0 0.0
      %v911 = vand.u32 %v202, 4294901760
      %v912 = vsub.f32 %v202, %v911
      %v913 = vand.u32 %v912, 4294901760
      %914 = vmatmul.mubr.f32.gmra.mxu0 %v913
      %v915 = vpop.f32.mrf.mxu0
      %v916 = vadd.f32 %v732, %v915
      %v917 = vpop.f32.mrf.mxu0
      %918 = vmatprep.mubr.f32.mxu0 0.0
      %v919 = vand.u32 %v205, 4294901760
      %v920 = vsub.f32 %v205, %v919
      %v921 = vand.u32 %v920, 4294901760
      %922 = vmatmul.mubr.f32.gmra.mxu0 %v921
      %v923 = vpop.f32.mrf.mxu0
      %v924 = vadd.f32 %v739, %v923
      %v925 = vpop.f32.mrf.mxu0
      %926 = vmatprep.mubr.f32.mxu0 0.0
      %v927 = vand.u32 %v208, 4294901760
      %v928 = vsub.f32 %v208, %v927
      %v929 = vand.u32 %v928, 4294901760
      %930 = vmatmul.mubr.f32.gmra.mxu0 %v929
      %v931 = vpop.f32.mrf.mxu0
      %v932 = vadd.f32 %v746, %v931
      %v933 = vpop.f32.mrf.mxu0
      %934 = vmatprep.mubr.f32.mxu0 0.0
      %v935 = vand.u32 %v211, 4294901760
      %v936 = vsub.f32 %v211, %v935
      %v937 = vand.u32 %v936, 4294901760
      %938 = vmatmul.mubr.f32.gmra.mxu0 %v937
      %v939 = vpop.f32.mrf.mxu0
      %v940 = vadd.f32 %v753, %v939
      %v941 = vpop.f32.mrf.mxu0
      %942 = vmatprep.mubr.f32.mxu0 0.0
      %v943 = vand.u32 %v214, 4294901760
      %v944 = vsub.f32 %v214, %v943
      %v945 = vand.u32 %v944, 4294901760
      %946 = vmatmul.mubr.f32.gmra.mxu0 %v945
      %v947 = vpop.f32.mrf.mxu0
      %v948 = vadd.f32 %v760, %v947
      %v949 = vpop.f32.mrf.mxu0
      %950 = vmatprep.mubr.f32.mxu0 0.0
      %v951 = vand.u32 %v217, 4294901760
      %v952 = vsub.f32 %v217, %v951
      %v953 = vand.u32 %v952, 4294901760
      %954 = vmatmul.mubr.f32.gmra.mxu0 %v953
      %v955 = vpop.f32.mrf.mxu0
      %v956 = vadd.f32 %v767, %v955
      %v957 = vpop.f32.mrf.mxu0
      %958 = vmatprep.mubr.f32.mxu0 0.0
      %v959 = vand.u32 %v220, 4294901760
      %v960 = vsub.f32 %v220, %v959
      %v961 = vand.u32 %v960, 4294901760
      %962 = vmatmul.mubr.f32.gmra.mxu0 %v961
      %v963 = vpop.f32.mrf.mxu0
      %v964 = vadd.f32 %v774, %v963
      %v965 = vpop.f32.mrf.mxu0
      %966 = vmatprep.mubr.f32.mxu0 0.0
      %v967 = vand.u32 %v223, 4294901760
      %v968 = vsub.f32 %v223, %v967
      %v969 = vand.u32 %v968, 4294901760
      %970 = vmatmul.mubr.f32.gmra.mxu0 %v969
      %v971 = vpop.f32.mrf.mxu0
      %v972 = vadd.f32 %v781, %v971
      %v973 = vpop.f32.mrf.mxu0
      %974 = vmatprep.mubr.f32.mxu0 0.0
      %v975 = vand.u32 %v226, 4294901760
      %v976 = vsub.f32 %v226, %v975
      %v977 = vand.u32 %v976, 4294901760
      %978 = vmatmul.mubr.f32.gmra.mxu0 %v977
      %v979 = vpop.f32.mrf.mxu0
      %v980 = vadd.f32 %v788, %v979
      %v981 = vpop.f32.mrf.mxu0
      %982 = vmatprep.mubr.f32.mxu0 0.0
      %v983 = vand.u32 %v229, 4294901760
      %v984 = vsub.f32 %v229, %v983
      %v985 = vand.u32 %v984, 4294901760
      %986 = vmatmul.mubr.f32.gmra.mxu0 %v985
      %v987 = vpop.f32.mrf.mxu0
      %v988 = vadd.f32 %v795, %v987
      %v989 = vpop.f32.mrf.mxu0
      %990 = vmatprep.mubr.f32.mxu0 0.0
      %v991 = vand.u32 %v232, 4294901760
      %v992 = vsub.f32 %v232, %v991
      %v993 = vand.u32 %v992, 4294901760
      %994 = vmatmul.mubr.f32.gmra.mxu0 %v993
      %v995 = vpop.f32.mrf.mxu0
      %v996 = vadd.f32 %v802, %v995
      %v997 = vpop.f32.mrf.mxu0
      %998 = vdwg.mxu0
      %999 = vmatprep.subr.mxu0 0.0
      %1000 = vmatpush1.msra.mxu0 0.0
      %1001 = vmatprep.subr.mxu0 0.0
      %1002 = vmatpush1.msra.mxu0 0.0
      %1003 = vmatprep.subr.mxu0 0.0
      %1004 = vmatpush1.msra.mxu0 0.0
      %1005 = vmatprep.subr.mxu0 0.0
      %1006 = vmatpush1.msra.mxu0 0.0
      %1007 = vmatprep.subr.mxu0 0.0
      %1008 = vmatpush1.msra.mxu0 0.0
      %1009 = vmatprep.subr.mxu0 0.0
      %1010 = vmatpush1.msra.mxu0 0.0
      %1011 = vmatprep.subr.mxu0 0.0
      %1012 = vmatpush1.msra.mxu0 0.0
      %1013 = vmatprep.subr.mxu0 0.0
      %1014 = vmatpush1.msra.mxu0 0.0
      %1015 = vmatprep.subr.mxu0 0.0
      %1016 = vmatpush1.msra.mxu0 0.0
      %1017 = vmatprep.subr.mxu0 0.0
      %1018 = vmatpush1.msra.mxu0 0.0
      %1019 = vmatprep.subr.mxu0 0.0
      %1020 = vmatpush1.msra.mxu0 0.0
      %1021 = vmatprep.subr.mxu0 0.0
      %1022 = vmatpush1.msra.mxu0 0.0
      %1023 = vmatprep.subr.mxu0 0.0
      %1024 = vmatpush1.msra.mxu0 0.0
      %1025 = vmatprep.subr.mxu0 0.0
      %1026 = vmatpush1.msra.mxu0 0.0
      %1027 = vmatprep.subr.mxu0 0.0
      %1028 = vmatpush1.msra.mxu0 0.0
      %1029 = vmatprep.subr.mxu0 0.0
      %v1030 = vand.u32 %v163, 4294901760
      %v1031 = vsub.f32 %v163, %v1030
      %v1032 = vand.u32 %v1031, 4294901760
      %1033 = vmatpush1.msra.mxu0 %v1032
      %1034 = vmatprep.subr.mxu0 0.0
      %1035 = vmatpush2.msra.mxu0 0.0
      %1036 = vmatprep.subr.mxu0 0.0
      %1037 = vmatpush2.msra.mxu0 0.0
      %1038 = vmatprep.subr.mxu0 0.0
      %1039 = vmatpush2.msra.mxu0 0.0
      %1040 = vmatprep.subr.mxu0 0.0
      %1041 = vmatpush2.msra.mxu0 0.0
      %1042 = vmatprep.subr.mxu0 0.0
      %1043 = vmatpush2.msra.mxu0 0.0
      %1044 = vmatprep.subr.mxu0 0.0
      %1045 = vmatpush2.msra.mxu0 0.0
      %1046 = vmatprep.subr.mxu0 0.0
      %1047 = vmatpush2.msra.mxu0 0.0
      %1048 = vmatprep.subr.mxu0 0.0
      %1049 = vmatpush2.msra.mxu0 0.0
      %1050 = vmatprep.subr.mxu0 0.0
      %1051 = vmatpush2.msra.mxu0 0.0
      %1052 = vmatprep.subr.mxu0 0.0
      %1053 = vmatpush2.msra.mxu0 0.0
      %1054 = vmatprep.subr.mxu0 0.0
      %1055 = vmatpush2.msra.mxu0 0.0
      %1056 = vmatprep.subr.mxu0 0.0
      %1057 = vmatpush2.msra.mxu0 0.0
      %1058 = vmatprep.subr.mxu0 0.0
      %1059 = vmatpush2.msra.mxu0 0.0
      %1060 = vmatprep.subr.mxu0 0.0
      %1061 = vmatpush2.msra.mxu0 0.0
      %1062 = vmatprep.subr.mxu0 0.0
      %1063 = vmatpush2.msra.mxu0 0.0
      %1064 = vmatprep.subr.mxu0 0.0
      %1065 = vmatpush2.msra.mxu0 0.0
      %1066 = vmatprep.mubr.f32.mxu0 0.0
      %v1067 = vand.u32 %v187, 4294901760
      %1068 = vmatmul.mubr.f32.gmra.mxu0 %v1067
      %v1069 = vpop.f32.mrf.mxu0
      %v1070 = vadd.f32 %v876, %v1069
      %v1071 = vpop.f32.mrf.mxu0
      %1072 = vmatprep.mubr.f32.mxu0 0.0
      %v1073 = vand.u32 %v190, 4294901760
      %1074 = vmatmul.mubr.f32.gmra.mxu0 %v1073
      %v1075 = vpop.f32.mrf.mxu0
      %v1076 = vadd.f32 %v884, %v1075
      %v1077 = vpop.f32.mrf.mxu0
      %1078 = vmatprep.mubr.f32.mxu0 0.0
      %v1079 = vand.u32 %v193, 4294901760
      %1080 = vmatmul.mubr.f32.gmra.mxu0 %v1079
      %v1081 = vpop.f32.mrf.mxu0
      %v1082 = vadd.f32 %v892, %v1081
      %v1083 = vpop.f32.mrf.mxu0
      %1084 = vmatprep.mubr.f32.mxu0 0.0
      %v1085 = vand.u32 %v196, 4294901760
      %1086 = vmatmul.mubr.f32.gmra.mxu0 %v1085
      %v1087 = vpop.f32.mrf.mxu0
      %v1088 = vadd.f32 %v900, %v1087
      %v1089 = vpop.f32.mrf.mxu0
      %1090 = vmatprep.mubr.f32.mxu0 0.0
      %v1091 = vand.u32 %v199, 4294901760
      %1092 = vmatmul.mubr.f32.gmra.mxu0 %v1091
      %v1093 = vpop.f32.mrf.mxu0
      %v1094 = vadd.f32 %v908, %v1093
      %v1095 = vpop.f32.mrf.mxu0
      %1096 = vmatprep.mubr.f32.mxu0 0.0
      %v1097 = vand.u32 %v202, 4294901760
      %1098 = vmatmul.mubr.f32.gmra.mxu0 %v1097
      %v1099 = vpop.f32.mrf.mxu0
      %v1100 = vadd.f32 %v916, %v1099
      %v1101 = vpop.f32.mrf.mxu0
      %1102 = vmatprep.mubr.f32.mxu0 0.0
      %v1103 = vand.u32 %v205, 4294901760
      %1104 = vmatmul.mubr.f32.gmra.mxu0 %v1103
      %v1105 = vpop.f32.mrf.mxu0
      %v1106 = vadd.f32 %v924, %v1105
      %v1107 = vpop.f32.mrf.mxu0
      %1108 = vmatprep.mubr.f32.mxu0 0.0
      %v1109 = vand.u32 %v208, 4294901760
      %1110 = vmatmul.mubr.f32.gmra.mxu0 %v1109
      %v1111 = vpop.f32.mrf.mxu0
      %v1112 = vadd.f32 %v932, %v1111
      %v1113 = vpop.f32.mrf.mxu0
      %1114 = vmatprep.mubr.f32.mxu0 0.0
      %v1115 = vand.u32 %v211, 4294901760
      %1116 = vmatmul.mubr.f32.gmra.mxu0 %v1115
      %v1117 = vpop.f32.mrf.mxu0
      %v1118 = vadd.f32 %v940, %v1117
      %v1119 = vpop.f32.mrf.mxu0
      %1120 = vmatprep.mubr.f32.mxu0 0.0
      %v1121 = vand.u32 %v214, 4294901760
      %1122 = vmatmul.mubr.f32.gmra.mxu0 %v1121
      %v1123 = vpop.f32.mrf.mxu0
      %v1124 = vadd.f32 %v948, %v1123
      %v1125 = vpop.f32.mrf.mxu0
      %1126 = vmatprep.mubr.f32.mxu0 0.0
      %v1127 = vand.u32 %v217, 4294901760
      %1128 = vmatmul.mubr.f32.gmra.mxu0 %v1127
      %v1129 = vpop.f32.mrf.mxu0
      %v1130 = vadd.f32 %v956, %v1129
      %v1131 = vpop.f32.mrf.mxu0
      %1132 = vmatprep.mubr.f32.mxu0 0.0
      %v1133 = vand.u32 %v220, 4294901760
      %1134 = vmatmul.mubr.f32.gmra.mxu0 %v1133
      %v1135 = vpop.f32.mrf.mxu0
      %v1136 = vadd.f32 %v964, %v1135
      %v1137 = vpop.f32.mrf.mxu0
      %1138 = vmatprep.mubr.f32.mxu0 0.0
      %v1139 = vand.u32 %v223, 4294901760
      %1140 = vmatmul.mubr.f32.gmra.mxu0 %v1139
      %v1141 = vpop.f32.mrf.mxu0
      %v1142 = vadd.f32 %v972, %v1141
      %v1143 = vpop.f32.mrf.mxu0
      %1144 = vmatprep.mubr.f32.mxu0 0.0
      %v1145 = vand.u32 %v226, 4294901760
      %1146 = vmatmul.mubr.f32.gmra.mxu0 %v1145
      %v1147 = vpop.f32.mrf.mxu0
      %v1148 = vadd.f32 %v980, %v1147
      %v1149 = vpop.f32.mrf.mxu0
      %1150 = vmatprep.mubr.f32.mxu0 0.0
      %v1151 = vand.u32 %v229, 4294901760
      %1152 = vmatmul.mubr.f32.gmra.mxu0 %v1151
      %v1153 = vpop.f32.mrf.mxu0
      %v1154 = vadd.f32 %v988, %v1153
      %v1155 = vpop.f32.mrf.mxu0
      %1156 = vmatprep.mubr.f32.mxu0 0.0
      %v1157 = vand.u32 %v232, 4294901760
      %1158 = vmatmul.mubr.f32.gmra.mxu0 %v1157
      %v1159 = vpop.f32.mrf.mxu0
      %v1160 = vadd.f32 %v996, %v1159
      %v1161 = vpop.f32.mrf.mxu0
      %1162 = vdwg.mxu0
      %1163 = vmatprep.subr.mxu0 0.0
      %1164 = vmatpush1.msra.mxu0 0.0
      %1165 = vmatprep.subr.mxu0 0.0
      %1166 = vmatpush1.msra.mxu0 0.0
      %1167 = vmatprep.subr.mxu0 0.0
      %1168 = vmatpush1.msra.mxu0 0.0
      %1169 = vmatprep.subr.mxu0 0.0
      %1170 = vmatpush1.msra.mxu0 0.0
      %1171 = vmatprep.subr.mxu0 0.0
      %1172 = vmatpush1.msra.mxu0 0.0
      %1173 = vmatprep.subr.mxu0 0.0
      %1174 = vmatpush1.msra.mxu0 0.0
      %1175 = vmatprep.subr.mxu0 0.0
      %1176 = vmatpush1.msra.mxu0 0.0
      %1177 = vmatprep.subr.mxu0 0.0
      %1178 = vmatpush1.msra.mxu0 0.0
      %1179 = vmatprep.subr.mxu0 0.0
      %1180 = vmatpush1.msra.mxu0 0.0
      %1181 = vmatprep.subr.mxu0 0.0
      %1182 = vmatpush1.msra.mxu0 0.0
      %1183 = vmatprep.subr.mxu0 0.0
      %1184 = vmatpush1.msra.mxu0 0.0
      %1185 = vmatprep.subr.mxu0 0.0
      %1186 = vmatpush1.msra.mxu0 0.0
      %1187 = vmatprep.subr.mxu0 0.0
      %1188 = vmatpush1.msra.mxu0 0.0
      %1189 = vmatprep.subr.mxu0 0.0
      %1190 = vmatpush1.msra.mxu0 0.0
      %1191 = vmatprep.subr.mxu0 0.0
      %1192 = vmatpush1.msra.mxu0 0.0
      %1193 = vmatprep.subr.mxu0 0.0
      %v1194 = vand.u32 %v163, 4294901760
      %1195 = vmatpush1.msra.mxu0 %v1194
      %1196 = vmatprep.subr.mxu0 0.0
      %1197 = vmatpush2.msra.mxu0 0.0
      %1198 = vmatprep.subr.mxu0 0.0
      %1199 = vmatpush2.msra.mxu0 0.0
      %1200 = vmatprep.subr.mxu0 0.0
      %1201 = vmatpush2.msra.mxu0 0.0
      %1202 = vmatprep.subr.mxu0 0.0
      %1203 = vmatpush2.msra.mxu0 0.0
      %1204 = vmatprep.subr.mxu0 0.0
      %1205 = vmatpush2.msra.mxu0 0.0
      %1206 = vmatprep.subr.mxu0 0.0
      %1207 = vmatpush2.msra.mxu0 0.0
      %1208 = vmatprep.subr.mxu0 0.0
      %1209 = vmatpush2.msra.mxu0 0.0
      %1210 = vmatprep.subr.mxu0 0.0
      %1211 = vmatpush2.msra.mxu0 0.0
      %1212 = vmatprep.subr.mxu0 0.0
      %1213 = vmatpush2.msra.mxu0 0.0
      %1214 = vmatprep.subr.mxu0 0.0
      %1215 = vmatpush2.msra.mxu0 0.0
      %1216 = vmatprep.subr.mxu0 0.0
      %1217 = vmatpush2.msra.mxu0 0.0
      %1218 = vmatprep.subr.mxu0 0.0
      %1219 = vmatpush2.msra.mxu0 0.0
      %1220 = vmatprep.subr.mxu0 0.0
      %1221 = vmatpush2.msra.mxu0 0.0
      %1222 = vmatprep.subr.mxu0 0.0
      %1223 = vmatpush2.msra.mxu0 0.0
      %1224 = vmatprep.subr.mxu0 0.0
      %1225 = vmatpush2.msra.mxu0 0.0
      %1226 = vmatprep.subr.mxu0 0.0
      %1227 = vmatpush2.msra.mxu0 0.0
      %1228 = vmatprep.mubr.f32.mxu0 0.0
      %v1229 = vand.u32 %v187, 4294901760
      %1230 = vmatmul.mubr.f32.gmra.mxu0 %v1229
      %v1231 = vpop.f32.mrf.mxu0
      %v1232 = vadd.f32 %v1070, %v1231
      %v1233 = vpop.f32.mrf.mxu0
      %1234 = vmatprep.mubr.f32.mxu0 0.0
      %v1235 = vand.u32 %v190, 4294901760
      %1236 = vmatmul.mubr.f32.gmra.mxu0 %v1235
      %v1237 = vpop.f32.mrf.mxu0
      %v1238 = vadd.f32 %v1076, %v1237
      %v1239 = vpop.f32.mrf.mxu0
      %1240 = vmatprep.mubr.f32.mxu0 0.0
      %v1241 = vand.u32 %v193, 4294901760
      %1242 = vmatmul.mubr.f32.gmra.mxu0 %v1241
      %v1243 = vpop.f32.mrf.mxu0
      %v1244 = vadd.f32 %v1082, %v1243
      %v1245 = vpop.f32.mrf.mxu0
      %1246 = vmatprep.mubr.f32.mxu0 0.0
      %v1247 = vand.u32 %v196, 4294901760
      %1248 = vmatmul.mubr.f32.gmra.mxu0 %v1247
      %v1249 = vpop.f32.mrf.mxu0
      %v1250 = vadd.f32 %v1088, %v1249
      %v1251 = vpop.f32.mrf.mxu0
      %1252 = vmatprep.mubr.f32.mxu0 0.0
      %v1253 = vand.u32 %v199, 4294901760
      %1254 = vmatmul.mubr.f32.gmra.mxu0 %v1253
      %v1255 = vpop.f32.mrf.mxu0
      %v1256 = vadd.f32 %v1094, %v1255
      %v1257 = vpop.f32.mrf.mxu0
      %1258 = vmatprep.mubr.f32.mxu0 0.0
      %v1259 = vand.u32 %v202, 4294901760
      %1260 = vmatmul.mubr.f32.gmra.mxu0 %v1259
      %v1261 = vpop.f32.mrf.mxu0
      %v1262 = vadd.f32 %v1100, %v1261
      %v1263 = vpop.f32.mrf.mxu0
      %1264 = vmatprep.mubr.f32.mxu0 0.0
      %v1265 = vand.u32 %v205, 4294901760
      %1266 = vmatmul.mubr.f32.gmra.mxu0 %v1265
      %v1267 = vpop.f32.mrf.mxu0
      %v1268 = vadd.f32 %v1106, %v1267
      %v1269 = vpop.f32.mrf.mxu0
      %1270 = vmatprep.mubr.f32.mxu0 0.0
      %v1271 = vand.u32 %v208, 4294901760
      %1272 = vmatmul.mubr.f32.gmra.mxu0 %v1271
      %v1273 = vpop.f32.mrf.mxu0
      %v1274 = vadd.f32 %v1112, %v1273
      %v1275 = vpop.f32.mrf.mxu0
      %1276 = vmatprep.mubr.f32.mxu0 0.0
      %v1277 = vand.u32 %v211, 4294901760
      %1278 = vmatmul.mubr.f32.gmra.mxu0 %v1277
      %v1279 = vpop.f32.mrf.mxu0
      %v1280 = vadd.f32 %v1118, %v1279
      %v1281 = vpop.f32.mrf.mxu0
      %1282 = vmatprep.mubr.f32.mxu0 0.0
      %v1283 = vand.u32 %v214, 4294901760
      %1284 = vmatmul.mubr.f32.gmra.mxu0 %v1283
      %v1285 = vpop.f32.mrf.mxu0
      %v1286 = vadd.f32 %v1124, %v1285
      %v1287 = vpop.f32.mrf.mxu0
      %1288 = vmatprep.mubr.f32.mxu0 0.0
      %v1289 = vand.u32 %v217, 4294901760
      %1290 = vmatmul.mubr.f32.gmra.mxu0 %v1289
      %v1291 = vpop.f32.mrf.mxu0
      %v1292 = vadd.f32 %v1130, %v1291
      %v1293 = vpop.f32.mrf.mxu0
      %1294 = vmatprep.mubr.f32.mxu0 0.0
      %v1295 = vand.u32 %v220, 4294901760
      %1296 = vmatmul.mubr.f32.gmra.mxu0 %v1295
      %v1297 = vpop.f32.mrf.mxu0
      %v1298 = vadd.f32 %v1136, %v1297
      %v1299 = vpop.f32.mrf.mxu0
      %1300 = vmatprep.mubr.f32.mxu0 0.0
      %v1301 = vand.u32 %v223, 4294901760
      %1302 = vmatmul.mubr.f32.gmra.mxu0 %v1301
      %v1303 = vpop.f32.mrf.mxu0
      %v1304 = vadd.f32 %v1142, %v1303
      %v1305 = vpop.f32.mrf.mxu0
      %1306 = vmatprep.mubr.f32.mxu0 0.0
      %v1307 = vand.u32 %v226, 4294901760
      %1308 = vmatmul.mubr.f32.gmra.mxu0 %v1307
      %v1309 = vpop.f32.mrf.mxu0
      %v1310 = vadd.f32 %v1148, %v1309
      %v1311 = vpop.f32.mrf.mxu0
      %1312 = vmatprep.mubr.f32.mxu0 0.0
      %v1313 = vand.u32 %v229, 4294901760
      %1314 = vmatmul.mubr.f32.gmra.mxu0 %v1313
      %v1315 = vpop.f32.mrf.mxu0
      %v1316 = vadd.f32 %v1154, %v1315
      %v1317 = vpop.f32.mrf.mxu0
      %1318 = vmatprep.mubr.f32.mxu0 0.0
      %v1319 = vand.u32 %v232, 4294901760
      %1320 = vmatmul.mubr.f32.gmra.mxu0 %v1319
      %v1321 = vpop.f32.mrf.mxu0
      %v1322 = vadd.f32 %v1160, %v1321
      %v1323 = vpop.f32.mrf.mxu0
      %1324 = vdwg.mxu0
      %v1325 = vmul.f32 %v1232, 0.01
      %v1326 = vmul.f32 %v1238, 0.01
      %v1327 = vmul.f32 %v1244, 0.01
      %v1328 = vmul.f32 %v1250, 0.01
      %v1329 = vmul.f32 %v1256, 0.01
      %v1330 = vmul.f32 %v1262, 0.01
      %v1331 = vmul.f32 %v1268, 0.01
      %v1332 = vmul.f32 %v1274, 0.01
      %v1333 = vmul.f32 %v1280, 0.01
      %v1334 = vmul.f32 %v1286, 0.01
      %v1335 = vmul.f32 %v1292, 0.01
      %v1336 = vmul.f32 %v1298, 0.01
      %v1337 = vmul.f32 %v1304, 0.01
      %v1338 = vmul.f32 %v1310, 0.01
      %v1339 = vmul.f32 %v1316, 0.01
      %v1340 = vmul.f32 %v1322, 0.01
      %v1341 = vmax.f32 %v1232, %v1325
      %v1342 = vmax.f32 %v1238, %v1326
      %v1343 = vmax.f32 %v1244, %v1327
      %v1344 = vmax.f32 %v1250, %v1328
      %v1345 = vmax.f32 %v1256, %v1329
      %v1346 = vmax.f32 %v1262, %v1330
      %v1347 = vmax.f32 %v1268, %v1331
      %v1348 = vmax.f32 %v1274, %v1332
      %v1349 = vmax.f32 %v1280, %v1333
      %v1350 = vmax.f32 %v1286, %v1334
      %v1351 = vmax.f32 %v1292, %v1335
      %v1352 = vmax.f32 %v1298, %v1336
      %v1353 = vmax.f32 %v1304, %v1337
      %v1354 = vmax.f32 %v1310, %v1338
      %v1355 = vmax.f32 %v1316, %v1339
      %v1356 = vmax.f32 %v1322, %v1340
      %v1357 = vlaneseq
      %v1358 = vshrl.u32 %v1357, 7
      %v1359 = vsub.s32 1, %v1358
      %v1360 = vrot.slane %v164, %v1359
      %1361 = vmatprep.subr.mxu0 0.0
      %v1362 = vand.u32 %v180, 4294901760
      %1363 = vmatpush1.msra.mxu0 %v1362
      %1364 = vmatprep.subr.mxu0 0.0
      %v1365 = vand.u32 %v179, 4294901760
      %1366 = vmatpush1.msra.mxu0 %v1365
      %1367 = vmatprep.subr.mxu0 0.0
      %v1368 = vand.u32 %v178, 4294901760
      %1369 = vmatpush1.msra.mxu0 %v1368
      %1370 = vmatprep.subr.mxu0 0.0
      %v1371 = vand.u32 %v177, 4294901760
      %1372 = vmatpush1.msra.mxu0 %v1371
      %1373 = vmatprep.subr.mxu0 0.0
      %v1374 = vand.u32 %v176, 4294901760
      %1375 = vmatpush1.msra.mxu0 %v1374
      %1376 = vmatprep.subr.mxu0 0.0
      %v1377 = vand.u32 %v175, 4294901760
      %1378 = vmatpush1.msra.mxu0 %v1377
      %1379 = vmatprep.subr.mxu0 0.0
      %v1380 = vand.u32 %v174, 4294901760
      %1381 = vmatpush1.msra.mxu0 %v1380
      %1382 = vmatprep.subr.mxu0 0.0
      %v1383 = vand.u32 %v173, 4294901760
      %1384 = vmatpush1.msra.mxu0 %v1383
      %1385 = vmatprep.subr.mxu0 0.0
      %v1386 = vand.u32 %v172, 4294901760
      %1387 = vmatpush1.msra.mxu0 %v1386
      %1388 = vmatprep.subr.mxu0 0.0
      %v1389 = vand.u32 %v171, 4294901760
      %1390 = vmatpush1.msra.mxu0 %v1389
      %1391 = vmatprep.subr.mxu0 0.0
      %v1392 = vand.u32 %v170, 4294901760
      %1393 = vmatpush1.msra.mxu0 %v1392
      %1394 = vmatprep.subr.mxu0 0.0
      %v1395 = vand.u32 %v169, 4294901760
      %1396 = vmatpush1.msra.mxu0 %v1395
      %1397 = vmatprep.subr.mxu0 0.0
      %v1398 = vand.u32 %v168, 4294901760
      %1399 = vmatpush1.msra.mxu0 %v1398
      %1400 = vmatprep.subr.mxu0 0.0
      %v1401 = vand.u32 %v167, 4294901760
      %1402 = vmatpush1.msra.mxu0 %v1401
      %1403 = vmatprep.subr.mxu0 0.0
      %v1404 = vand.u32 %v166, 4294901760
      %1405 = vmatpush1.msra.mxu0 %v1404
      %1406 = vmatprep.subr.mxu0 0.0
      %v1407 = vand.u32 %v165, 4294901760
      %1408 = vmatpush1.msra.mxu0 %v1407
      %1409 = vmatprep.subr.mxu0 0.0
      %1410 = vmatpush2.msra.mxu0 0.0
      %1411 = vmatprep.subr.mxu0 0.0
      %1412 = vmatpush2.msra.mxu0 0.0
      %1413 = vmatprep.subr.mxu0 0.0
      %1414 = vmatpush2.msra.mxu0 0.0
      %1415 = vmatprep.subr.mxu0 0.0
      %1416 = vmatpush2.msra.mxu0 0.0
      %1417 = vmatprep.subr.mxu0 0.0
      %1418 = vmatpush2.msra.mxu0 0.0
      %1419 = vmatprep.subr.mxu0 0.0
      %1420 = vmatpush2.msra.mxu0 0.0
      %1421 = vmatprep.subr.mxu0 0.0
      %1422 = vmatpush2.msra.mxu0 0.0
      %1423 = vmatprep.subr.mxu0 0.0
      %1424 = vmatpush2.msra.mxu0 0.0
      %1425 = vmatprep.subr.mxu0 0.0
      %1426 = vmatpush2.msra.mxu0 0.0
      %1427 = vmatprep.subr.mxu0 0.0
      %1428 = vmatpush2.msra.mxu0 0.0
      %1429 = vmatprep.subr.mxu0 0.0
      %1430 = vmatpush2.msra.mxu0 0.0
      %1431 = vmatprep.subr.mxu0 0.0
      %1432 = vmatpush2.msra.mxu0 0.0
      %1433 = vmatprep.subr.mxu0 0.0
      %1434 = vmatpush2.msra.mxu0 0.0
      %1435 = vmatprep.subr.mxu0 0.0
      %1436 = vmatpush2.msra.mxu0 0.0
      %1437 = vmatprep.subr.mxu0 0.0
      %1438 = vmatpush2.msra.mxu0 0.0
      %1439 = vmatprep.subr.mxu0 0.0
      %1440 = vmatpush2.msra.mxu0 0.0
      %1441 = vmatprep.mubr.f32.mxu0 0.0
      %v1442 = vand.u32 %v1341, 4294901760
      %v1443 = vsub.f32 %v1341, %v1442
      %v1444 = vand.u32 %v1443, 4294901760
      %v1445 = vsub.f32 %v1443, %v1444
      %v1446 = vand.u32 %v1445, 4294901760
      %1447 = vmatmul.mubr.f32.gmra.mxu0 %v1446
      %v1448 = vpop.f32.mrf.mxu0
      %v1449 = vadd.f32 %v1360, %v1448
      %v1450 = vpop.f32.mrf.mxu0
      %1451 = vmatprep.mubr.f32.mxu0 0.0
      %v1452 = vand.u32 %v1342, 4294901760
      %v1453 = vsub.f32 %v1342, %v1452
      %v1454 = vand.u32 %v1453, 4294901760
      %v1455 = vsub.f32 %v1453, %v1454
      %v1456 = vand.u32 %v1455, 4294901760
      %1457 = vmatmul.mubr.f32.gmra.mxu0 %v1456
      %v1458 = vpop.f32.mrf.mxu0
      %v1459 = vadd.f32 %v1360, %v1458
      %v1460 = vpop.f32.mrf.mxu0
      %1461 = vmatprep.mubr.f32.mxu0 0.0
      %v1462 = vand.u32 %v1343, 4294901760
      %v1463 = vsub.f32 %v1343, %v1462
      %v1464 = vand.u32 %v1463, 4294901760
      %v1465 = vsub.f32 %v1463, %v1464
      %v1466 = vand.u32 %v1465, 4294901760
      %1467 = vmatmul.mubr.f32.gmra.mxu0 %v1466
      %v1468 = vpop.f32.mrf.mxu0
      %v1469 = vadd.f32 %v1360, %v1468
      %v1470 = vpop.f32.mrf.mxu0
      %1471 = vmatprep.mubr.f32.mxu0 0.0
      %v1472 = vand.u32 %v1344, 4294901760
      %v1473 = vsub.f32 %v1344, %v1472
      %v1474 = vand.u32 %v1473, 4294901760
      %v1475 = vsub.f32 %v1473, %v1474
      %v1476 = vand.u32 %v1475, 4294901760
      %1477 = vmatmul.mubr.f32.gmra.mxu0 %v1476
      %v1478 = vpop.f32.mrf.mxu0
      %v1479 = vadd.f32 %v1360, %v1478
      %v1480 = vpop.f32.mrf.mxu0
      %1481 = vmatprep.mubr.f32.mxu0 0.0
      %v1482 = vand.u32 %v1345, 4294901760
      %v1483 = vsub.f32 %v1345, %v1482
      %v1484 = vand.u32 %v1483, 4294901760
      %v1485 = vsub.f32 %v1483, %v1484
      %v1486 = vand.u32 %v1485, 4294901760
      %1487 = vmatmul.mubr.f32.gmra.mxu0 %v1486
      %v1488 = vpop.f32.mrf.mxu0
      %v1489 = vadd.f32 %v1360, %v1488
      %v1490 = vpop.f32.mrf.mxu0
      %1491 = vmatprep.mubr.f32.mxu0 0.0
      %v1492 = vand.u32 %v1346, 4294901760
      %v1493 = vsub.f32 %v1346, %v1492
      %v1494 = vand.u32 %v1493, 4294901760
      %v1495 = vsub.f32 %v1493, %v1494
      %v1496 = vand.u32 %v1495, 4294901760
      %1497 = vmatmul.mubr.f32.gmra.mxu0 %v1496
      %v1498 = vpop.f32.mrf.mxu0
      %v1499 = vadd.f32 %v1360, %v1498
      %v1500 = vpop.f32.mrf.mxu0
      %1501 = vmatprep.mubr.f32.mxu0 0.0
      %v1502 = vand.u32 %v1347, 4294901760
      %v1503 = vsub.f32 %v1347, %v1502
      %v1504 = vand.u32 %v1503, 4294901760
      %v1505 = vsub.f32 %v1503, %v1504
      %v1506 = vand.u32 %v1505, 4294901760
      %1507 = vmatmul.mubr.f32.gmra.mxu0 %v1506
      %v1508 = vpop.f32.mrf.mxu0
      %v1509 = vadd.f32 %v1360, %v1508
      %v1510 = vpop.f32.mrf.mxu0
      %1511 = vmatprep.mubr.f32.mxu0 0.0
      %v1512 = vand.u32 %v1348, 4294901760
      %v1513 = vsub.f32 %v1348, %v1512
      %v1514 = vand.u32 %v1513, 4294901760
      %v1515 = vsub.f32 %v1513, %v1514
      %v1516 = vand.u32 %v1515, 4294901760
      %1517 = vmatmul.mubr.f32.gmra.mxu0 %v1516
      %v1518 = vpop.f32.mrf.mxu0
      %v1519 = vadd.f32 %v1360, %v1518
      %v1520 = vpop.f32.mrf.mxu0
      %1521 = vmatprep.mubr.f32.mxu0 0.0
      %v1522 = vand.u32 %v1349, 4294901760
      %v1523 = vsub.f32 %v1349, %v1522
      %v1524 = vand.u32 %v1523, 4294901760
      %v1525 = vsub.f32 %v1523, %v1524
      %v1526 = vand.u32 %v1525, 4294901760
      %1527 = vmatmul.mubr.f32.gmra.mxu0 %v1526
      %v1528 = vpop.f32.mrf.mxu0
      %v1529 = vadd.f32 %v1360, %v1528
      %v1530 = vpop.f32.mrf.mxu0
      %1531 = vmatprep.mubr.f32.mxu0 0.0
      %v1532 = vand.u32 %v1350, 4294901760
      %v1533 = vsub.f32 %v1350, %v1532
      %v1534 = vand.u32 %v1533, 4294901760
      %v1535 = vsub.f32 %v1533, %v1534
      %v1536 = vand.u32 %v1535, 4294901760
      %1537 = vmatmul.mubr.f32.gmra.mxu0 %v1536
      %v1538 = vpop.f32.mrf.mxu0
      %v1539 = vadd.f32 %v1360, %v1538
      %v1540 = vpop.f32.mrf.mxu0
      %1541 = vmatprep.mubr.f32.mxu0 0.0
      %v1542 = vand.u32 %v1351, 4294901760
      %v1543 = vsub.f32 %v1351, %v1542
      %v1544 = vand.u32 %v1543, 4294901760
      %v1545 = vsub.f32 %v1543, %v1544
      %v1546 = vand.u32 %v1545, 4294901760
      %1547 = vmatmul.mubr.f32.gmra.mxu0 %v1546
      %v1548 = vpop.f32.mrf.mxu0
      %v1549 = vadd.f32 %v1360, %v1548
      %v1550 = vpop.f32.mrf.mxu0
      %1551 = vmatprep.mubr.f32.mxu0 0.0
      %v1552 = vand.u32 %v1352, 4294901760
      %v1553 = vsub.f32 %v1352, %v1552
      %v1554 = vand.u32 %v1553, 4294901760
      %v1555 = vsub.f32 %v1553, %v1554
      %v1556 = vand.u32 %v1555, 4294901760
      %1557 = vmatmul.mubr.f32.gmra.mxu0 %v1556
      %v1558 = vpop.f32.mrf.mxu0
      %v1559 = vadd.f32 %v1360, %v1558
      %v1560 = vpop.f32.mrf.mxu0
      %1561 = vmatprep.mubr.f32.mxu0 0.0
      %v1562 = vand.u32 %v1353, 4294901760
      %v1563 = vsub.f32 %v1353, %v1562
      %v1564 = vand.u32 %v1563, 4294901760
      %v1565 = vsub.f32 %v1563, %v1564
      %v1566 = vand.u32 %v1565, 4294901760
      %1567 = vmatmul.mubr.f32.gmra.mxu0 %v1566
      %v1568 = vpop.f32.mrf.mxu0
      %v1569 = vadd.f32 %v1360, %v1568
      %v1570 = vpop.f32.mrf.mxu0
      %1571 = vmatprep.mubr.f32.mxu0 0.0
      %v1572 = vand.u32 %v1354, 4294901760
      %v1573 = vsub.f32 %v1354, %v1572
      %v1574 = vand.u32 %v1573, 4294901760
      %v1575 = vsub.f32 %v1573, %v1574
      %v1576 = vand.u32 %v1575, 4294901760
      %1577 = vmatmul.mubr.f32.gmra.mxu0 %v1576
      %v1578 = vpop.f32.mrf.mxu0
      %v1579 = vadd.f32 %v1360, %v1578
      %v1580 = vpop.f32.mrf.mxu0
      %1581 = vmatprep.mubr.f32.mxu0 0.0
      %v1582 = vand.u32 %v1355, 4294901760
      %v1583 = vsub.f32 %v1355, %v1582
      %v1584 = vand.u32 %v1583, 4294901760
      %v1585 = vsub.f32 %v1583, %v1584
      %v1586 = vand.u32 %v1585, 4294901760
      %1587 = vmatmul.mubr.f32.gmra.mxu0 %v1586
      %v1588 = vpop.f32.mrf.mxu0
      %v1589 = vadd.f32 %v1360, %v1588
      %v1590 = vpop.f32.mrf.mxu0
      %1591 = vmatprep.mubr.f32.mxu0 0.0
      %v1592 = vand.u32 %v1356, 4294901760
      %v1593 = vsub.f32 %v1356, %v1592
      %v1594 = vand.u32 %v1593, 4294901760
      %v1595 = vsub.f32 %v1593, %v1594
      %v1596 = vand.u32 %v1595, 4294901760
      %1597 = vmatmul.mubr.f32.gmra.mxu0 %v1596
      %v1598 = vpop.f32.mrf.mxu0
      %v1599 = vadd.f32 %v1360, %v1598
      %v1600 = vpop.f32.mrf.mxu0
      %1601 = vdwg.mxu0
      %1602 = vmatprep.subr.mxu0 0.0
      %v1603 = vand.u32 %v180, 4294901760
      %v1604 = vsub.f32 %v180, %v1603
      %v1605 = vand.u32 %v1604, 4294901760
      %v1606 = vsub.f32 %v1604, %v1605
      %v1607 = vand.u32 %v1606, 4294901760
      %1608 = vmatpush1.msra.mxu0 %v1607
      %1609 = vmatprep.subr.mxu0 0.0
      %v1610 = vand.u32 %v179, 4294901760
      %v1611 = vsub.f32 %v179, %v1610
      %v1612 = vand.u32 %v1611, 4294901760
      %v1613 = vsub.f32 %v1611, %v1612
      %v1614 = vand.u32 %v1613, 4294901760
      %1615 = vmatpush1.msra.mxu0 %v1614
      %1616 = vmatprep.subr.mxu0 0.0
      %v1617 = vand.u32 %v178, 4294901760
      %v1618 = vsub.f32 %v178, %v1617
      %v1619 = vand.u32 %v1618, 4294901760
      %v1620 = vsub.f32 %v1618, %v1619
      %v1621 = vand.u32 %v1620, 4294901760
      %1622 = vmatpush1.msra.mxu0 %v1621
      %1623 = vmatprep.subr.mxu0 0.0
      %v1624 = vand.u32 %v177, 4294901760
      %v1625 = vsub.f32 %v177, %v1624
      %v1626 = vand.u32 %v1625, 4294901760
      %v1627 = vsub.f32 %v1625, %v1626
      %v1628 = vand.u32 %v1627, 4294901760
      %1629 = vmatpush1.msra.mxu0 %v1628
      %1630 = vmatprep.subr.mxu0 0.0
      %v1631 = vand.u32 %v176, 4294901760
      %v1632 = vsub.f32 %v176, %v1631
      %v1633 = vand.u32 %v1632, 4294901760
      %v1634 = vsub.f32 %v1632, %v1633
      %v1635 = vand.u32 %v1634, 4294901760
      %1636 = vmatpush1.msra.mxu0 %v1635
      %1637 = vmatprep.subr.mxu0 0.0
      %v1638 = vand.u32 %v175, 4294901760
      %v1639 = vsub.f32 %v175, %v1638
      %v1640 = vand.u32 %v1639, 4294901760
      %v1641 = vsub.f32 %v1639, %v1640
      %v1642 = vand.u32 %v1641, 4294901760
      %1643 = vmatpush1.msra.mxu0 %v1642
      %1644 = vmatprep.subr.mxu0 0.0
      %v1645 = vand.u32 %v174, 4294901760
      %v1646 = vsub.f32 %v174, %v1645
      %v1647 = vand.u32 %v1646, 4294901760
      %v1648 = vsub.f32 %v1646, %v1647
      %v1649 = vand.u32 %v1648, 4294901760
      %1650 = vmatpush1.msra.mxu0 %v1649
      %1651 = vmatprep.subr.mxu0 0.0
      %v1652 = vand.u32 %v173, 4294901760
      %v1653 = vsub.f32 %v173, %v1652
      %v1654 = vand.u32 %v1653, 4294901760
      %v1655 = vsub.f32 %v1653, %v1654
      %v1656 = vand.u32 %v1655, 4294901760
      %1657 = vmatpush1.msra.mxu0 %v1656
      %1658 = vmatprep.subr.mxu0 0.0
      %v1659 = vand.u32 %v172, 4294901760
      %v1660 = vsub.f32 %v172, %v1659
      %v1661 = vand.u32 %v1660, 4294901760
      %v1662 = vsub.f32 %v1660, %v1661
      %v1663 = vand.u32 %v1662, 4294901760
      %1664 = vmatpush1.msra.mxu0 %v1663
      %1665 = vmatprep.subr.mxu0 0.0
      %v1666 = vand.u32 %v171, 4294901760
      %v1667 = vsub.f32 %v171, %v1666
      %v1668 = vand.u32 %v1667, 4294901760
      %v1669 = vsub.f32 %v1667, %v1668
      %v1670 = vand.u32 %v1669, 4294901760
      %1671 = vmatpush1.msra.mxu0 %v1670
      %1672 = vmatprep.subr.mxu0 0.0
      %v1673 = vand.u32 %v170, 4294901760
      %v1674 = vsub.f32 %v170, %v1673
      %v1675 = vand.u32 %v1674, 4294901760
      %v1676 = vsub.f32 %v1674, %v1675
      %v1677 = vand.u32 %v1676, 4294901760
      %1678 = vmatpush1.msra.mxu0 %v1677
      %1679 = vmatprep.subr.mxu0 0.0
      %v1680 = vand.u32 %v169, 4294901760
      %v1681 = vsub.f32 %v169, %v1680
      %v1682 = vand.u32 %v1681, 4294901760
      %v1683 = vsub.f32 %v1681, %v1682
      %v1684 = vand.u32 %v1683, 4294901760
      %1685 = vmatpush1.msra.mxu0 %v1684
      %1686 = vmatprep.subr.mxu0 0.0
      %v1687 = vand.u32 %v168, 4294901760
      %v1688 = vsub.f32 %v168, %v1687
      %v1689 = vand.u32 %v1688, 4294901760
      %v1690 = vsub.f32 %v1688, %v1689
      %v1691 = vand.u32 %v1690, 4294901760
      %1692 = vmatpush1.msra.mxu0 %v1691
      %1693 = vmatprep.subr.mxu0 0.0
      %v1694 = vand.u32 %v167, 4294901760
      %v1695 = vsub.f32 %v167, %v1694
      %v1696 = vand.u32 %v1695, 4294901760
      %v1697 = vsub.f32 %v1695, %v1696
      %v1698 = vand.u32 %v1697, 4294901760
      %1699 = vmatpush1.msra.mxu0 %v1698
      %1700 = vmatprep.subr.mxu0 0.0
      %v1701 = vand.u32 %v166, 4294901760
      %v1702 = vsub.f32 %v166, %v1701
      %v1703 = vand.u32 %v1702, 4294901760
      %v1704 = vsub.f32 %v1702, %v1703
      %v1705 = vand.u32 %v1704, 4294901760
      %1706 = vmatpush1.msra.mxu0 %v1705
      %1707 = vmatprep.subr.mxu0 0.0
      %v1708 = vand.u32 %v165, 4294901760
      %v1709 = vsub.f32 %v165, %v1708
      %v1710 = vand.u32 %v1709, 4294901760
      %v1711 = vsub.f32 %v1709, %v1710
      %v1712 = vand.u32 %v1711, 4294901760
      %1713 = vmatpush1.msra.mxu0 %v1712
      %1714 = vmatprep.subr.mxu0 0.0
      %1715 = vmatpush2.msra.mxu0 0.0
      %1716 = vmatprep.subr.mxu0 0.0
      %1717 = vmatpush2.msra.mxu0 0.0
      %1718 = vmatprep.subr.mxu0 0.0
      %1719 = vmatpush2.msra.mxu0 0.0
      %1720 = vmatprep.subr.mxu0 0.0
      %1721 = vmatpush2.msra.mxu0 0.0
      %1722 = vmatprep.subr.mxu0 0.0
      %1723 = vmatpush2.msra.mxu0 0.0
      %1724 = vmatprep.subr.mxu0 0.0
      %1725 = vmatpush2.msra.mxu0 0.0
      %1726 = vmatprep.subr.mxu0 0.0
      %1727 = vmatpush2.msra.mxu0 0.0
      %1728 = vmatprep.subr.mxu0 0.0
      %1729 = vmatpush2.msra.mxu0 0.0
      %1730 = vmatprep.subr.mxu0 0.0
      %1731 = vmatpush2.msra.mxu0 0.0
      %1732 = vmatprep.subr.mxu0 0.0
      %1733 = vmatpush2.msra.mxu0 0.0
      %1734 = vmatprep.subr.mxu0 0.0
      %1735 = vmatpush2.msra.mxu0 0.0
      %1736 = vmatprep.subr.mxu0 0.0
      %1737 = vmatpush2.msra.mxu0 0.0
      %1738 = vmatprep.subr.mxu0 0.0
      %1739 = vmatpush2.msra.mxu0 0.0
      %1740 = vmatprep.subr.mxu0 0.0
      %1741 = vmatpush2.msra.mxu0 0.0
      %1742 = vmatprep.subr.mxu0 0.0
      %1743 = vmatpush2.msra.mxu0 0.0
      %1744 = vmatprep.subr.mxu0 0.0
      %1745 = vmatpush2.msra.mxu0 0.0
      %1746 = vmatprep.mubr.f32.mxu0 0.0
      %v1747 = vand.u32 %v1341, 4294901760
      %1748 = vmatmul.mubr.f32.gmra.mxu0 %v1747
      %v1749 = vpop.f32.mrf.mxu0
      %v1750 = vadd.f32 %v1449, %v1749
      %v1751 = vpop.f32.mrf.mxu0
      %1752 = vmatprep.mubr.f32.mxu0 0.0
      %v1753 = vand.u32 %v1342, 4294901760
      %1754 = vmatmul.mubr.f32.gmra.mxu0 %v1753
      %v1755 = vpop.f32.mrf.mxu0
      %v1756 = vadd.f32 %v1459, %v1755
      %v1757 = vpop.f32.mrf.mxu0
      %1758 = vmatprep.mubr.f32.mxu0 0.0
      %v1759 = vand.u32 %v1343, 4294901760
      %1760 = vmatmul.mubr.f32.gmra.mxu0 %v1759
      %v1761 = vpop.f32.mrf.mxu0
      %v1762 = vadd.f32 %v1469, %v1761
      %v1763 = vpop.f32.mrf.mxu0
      %1764 = vmatprep.mubr.f32.mxu0 0.0
      %v1765 = vand.u32 %v1344, 4294901760
      %1766 = vmatmul.mubr.f32.gmra.mxu0 %v1765
      %v1767 = vpop.f32.mrf.mxu0
      %v1768 = vadd.f32 %v1479, %v1767
      %v1769 = vpop.f32.mrf.mxu0
      %1770 = vmatprep.mubr.f32.mxu0 0.0
      %v1771 = vand.u32 %v1345, 4294901760
      %1772 = vmatmul.mubr.f32.gmra.mxu0 %v1771
      %v1773 = vpop.f32.mrf.mxu0
      %v1774 = vadd.f32 %v1489, %v1773
      %v1775 = vpop.f32.mrf.mxu0
      %1776 = vmatprep.mubr.f32.mxu0 0.0
      %v1777 = vand.u32 %v1346, 4294901760
      %1778 = vmatmul.mubr.f32.gmra.mxu0 %v1777
      %v1779 = vpop.f32.mrf.mxu0
      %v1780 = vadd.f32 %v1499, %v1779
      %v1781 = vpop.f32.mrf.mxu0
      %1782 = vmatprep.mubr.f32.mxu0 0.0
      %v1783 = vand.u32 %v1347, 4294901760
      %1784 = vmatmul.mubr.f32.gmra.mxu0 %v1783
      %v1785 = vpop.f32.mrf.mxu0
      %v1786 = vadd.f32 %v1509, %v1785
      %v1787 = vpop.f32.mrf.mxu0
      %1788 = vmatprep.mubr.f32.mxu0 0.0
      %v1789 = vand.u32 %v1348, 4294901760
      %1790 = vmatmul.mubr.f32.gmra.mxu0 %v1789
      %v1791 = vpop.f32.mrf.mxu0
      %v1792 = vadd.f32 %v1519, %v1791
      %v1793 = vpop.f32.mrf.mxu0
      %1794 = vmatprep.mubr.f32.mxu0 0.0
      %v1795 = vand.u32 %v1349, 4294901760
      %1796 = vmatmul.mubr.f32.gmra.mxu0 %v1795
      %v1797 = vpop.f32.mrf.mxu0
      %v1798 = vadd.f32 %v1529, %v1797
      %v1799 = vpop.f32.mrf.mxu0
      %1800 = vmatprep.mubr.f32.mxu0 0.0
      %v1801 = vand.u32 %v1350, 4294901760
      %1802 = vmatmul.mubr.f32.gmra.mxu0 %v1801
      %v1803 = vpop.f32.mrf.mxu0
      %v1804 = vadd.f32 %v1539, %v1803
      %v1805 = vpop.f32.mrf.mxu0
      %1806 = vmatprep.mubr.f32.mxu0 0.0
      %v1807 = vand.u32 %v1351, 4294901760
      %1808 = vmatmul.mubr.f32.gmra.mxu0 %v1807
      %v1809 = vpop.f32.mrf.mxu0
      %v1810 = vadd.f32 %v1549, %v1809
      %v1811 = vpop.f32.mrf.mxu0
      %1812 = vmatprep.mubr.f32.mxu0 0.0
      %v1813 = vand.u32 %v1352, 4294901760
      %1814 = vmatmul.mubr.f32.gmra.mxu0 %v1813
      %v1815 = vpop.f32.mrf.mxu0
      %v1816 = vadd.f32 %v1559, %v1815
      %v1817 = vpop.f32.mrf.mxu0
      %1818 = vmatprep.mubr.f32.mxu0 0.0
      %v1819 = vand.u32 %v1353, 4294901760
      %1820 = vmatmul.mubr.f32.gmra.mxu0 %v1819
      %v1821 = vpop.f32.mrf.mxu0
      %v1822 = vadd.f32 %v1569, %v1821
      %v1823 = vpop.f32.mrf.mxu0
      %1824 = vmatprep.mubr.f32.mxu0 0.0
      %v1825 = vand.u32 %v1354, 4294901760
      %1826 = vmatmul.mubr.f32.gmra.mxu0 %v1825
      %v1827 = vpop.f32.mrf.mxu0
      %v1828 = vadd.f32 %v1579, %v1827
      %v1829 = vpop.f32.mrf.mxu0
      %1830 = vmatprep.mubr.f32.mxu0 0.0
      %v1831 = vand.u32 %v1355, 4294901760
      %1832 = vmatmul.mubr.f32.gmra.mxu0 %v1831
      %v1833 = vpop.f32.mrf.mxu0
      %v1834 = vadd.f32 %v1589, %v1833
      %v1835 = vpop.f32.mrf.mxu0
      %1836 = vmatprep.mubr.f32.mxu0 0.0
      %v1837 = vand.u32 %v1356, 4294901760
      %1838 = vmatmul.mubr.f32.gmra.mxu0 %v1837
      %v1839 = vpop.f32.mrf.mxu0
      %v1840 = vadd.f32 %v1599, %v1839
      %v1841 = vpop.f32.mrf.mxu0
      %1842 = vdwg.mxu0
      %1843 = vmatprep.subr.mxu0 0.0
      %v1844 = vand.u32 %v180, 4294901760
      %v1845 = vsub.f32 %v180, %v1844
      %1846 = vmatpush1.msra.mxu0 %v1845
      %1847 = vmatprep.subr.mxu0 0.0
      %v1848 = vand.u32 %v179, 4294901760
      %v1849 = vsub.f32 %v179, %v1848
      %1850 = vmatpush1.msra.mxu0 %v1849
      %1851 = vmatprep.subr.mxu0 0.0
      %v1852 = vand.u32 %v178, 4294901760
      %v1853 = vsub.f32 %v178, %v1852
      %1854 = vmatpush1.msra.mxu0 %v1853
      %1855 = vmatprep.subr.mxu0 0.0
      %v1856 = vand.u32 %v177, 4294901760
      %v1857 = vsub.f32 %v177, %v1856
      %1858 = vmatpush1.msra.mxu0 %v1857
      %1859 = vmatprep.subr.mxu0 0.0
      %v1860 = vand.u32 %v176, 4294901760
      %v1861 = vsub.f32 %v176, %v1860
      %1862 = vmatpush1.msra.mxu0 %v1861
      %1863 = vmatprep.subr.mxu0 0.0
      %v1864 = vand.u32 %v175, 4294901760
      %v1865 = vsub.f32 %v175, %v1864
      %1866 = vmatpush1.msra.mxu0 %v1865
      %1867 = vmatprep.subr.mxu0 0.0
      %v1868 = vand.u32 %v174, 4294901760
      %v1869 = vsub.f32 %v174, %v1868
      %1870 = vmatpush1.msra.mxu0 %v1869
      %1871 = vmatprep.subr.mxu0 0.0
      %v1872 = vand.u32 %v173, 4294901760
      %v1873 = vsub.f32 %v173, %v1872
      %1874 = vmatpush1.msra.mxu0 %v1873
      %1875 = vmatprep.subr.mxu0 0.0
      %v1876 = vand.u32 %v172, 4294901760
      %v1877 = vsub.f32 %v172, %v1876
      %1878 = vmatpush1.msra.mxu0 %v1877
      %1879 = vmatprep.subr.mxu0 0.0
      %v1880 = vand.u32 %v171, 4294901760
      %v1881 = vsub.f32 %v171, %v1880
      %1882 = vmatpush1.msra.mxu0 %v1881
      %1883 = vmatprep.subr.mxu0 0.0
      %v1884 = vand.u32 %v170, 4294901760
      %v1885 = vsub.f32 %v170, %v1884
      %1886 = vmatpush1.msra.mxu0 %v1885
      %1887 = vmatprep.subr.mxu0 0.0
      %v1888 = vand.u32 %v169, 4294901760
      %v1889 = vsub.f32 %v169, %v1888
      %1890 = vmatpush1.msra.mxu0 %v1889
      %1891 = vmatprep.subr.mxu0 0.0
      %v1892 = vand.u32 %v168, 4294901760
      %v1893 = vsub.f32 %v168, %v1892
      %1894 = vmatpush1.msra.mxu0 %v1893
      %1895 = vmatprep.subr.mxu0 0.0
      %v1896 = vand.u32 %v167, 4294901760
      %v1897 = vsub.f32 %v167, %v1896
      %1898 = vmatpush1.msra.mxu0 %v1897
      %1899 = vmatprep.subr.mxu0 0.0
      %v1900 = vand.u32 %v166, 4294901760
      %v1901 = vsub.f32 %v166, %v1900
      %1902 = vmatpush1.msra.mxu0 %v1901
      %1903 = vmatprep.subr.mxu0 0.0
      %v1904 = vand.u32 %v165, 4294901760
      %v1905 = vsub.f32 %v165, %v1904
      %1906 = vmatpush1.msra.mxu0 %v1905
      %1907 = vmatprep.subr.mxu0 0.0
      %1908 = vmatpush2.msra.mxu0 0.0
      %1909 = vmatprep.subr.mxu0 0.0
      %1910 = vmatpush2.msra.mxu0 0.0
      %1911 = vmatprep.subr.mxu0 0.0
      %1912 = vmatpush2.msra.mxu0 0.0
      %1913 = vmatprep.subr.mxu0 0.0
      %1914 = vmatpush2.msra.mxu0 0.0
      %1915 = vmatprep.subr.mxu0 0.0
      %1916 = vmatpush2.msra.mxu0 0.0
      %1917 = vmatprep.subr.mxu0 0.0
      %1918 = vmatpush2.msra.mxu0 0.0
      %1919 = vmatprep.subr.mxu0 0.0
      %1920 = vmatpush2.msra.mxu0 0.0
      %1921 = vmatprep.subr.mxu0 0.0
      %1922 = vmatpush2.msra.mxu0 0.0
      %1923 = vmatprep.subr.mxu0 0.0
      %1924 = vmatpush2.msra.mxu0 0.0
      %1925 = vmatprep.subr.mxu0 0.0
      %1926 = vmatpush2.msra.mxu0 0.0
      %1927 = vmatprep.subr.mxu0 0.0
      %1928 = vmatpush2.msra.mxu0 0.0
      %1929 = vmatprep.subr.mxu0 0.0
      %1930 = vmatpush2.msra.mxu0 0.0
      %1931 = vmatprep.subr.mxu0 0.0
      %1932 = vmatpush2.msra.mxu0 0.0
      %1933 = vmatprep.subr.mxu0 0.0
      %1934 = vmatpush2.msra.mxu0 0.0
      %1935 = vmatprep.subr.mxu0 0.0
      %1936 = vmatpush2.msra.mxu0 0.0
      %1937 = vmatprep.subr.mxu0 0.0
      %1938 = vmatpush2.msra.mxu0 0.0
      %1939 = vmatprep.mubr.f32.mxu0 0.0
      %v1940 = vand.u32 %v1341, 4294901760
      %v1941 = vsub.f32 %v1341, %v1940
      %1942 = vmatmul.mubr.f32.gmra.mxu0 %v1941
      %v1943 = vpop.f32.mrf.mxu0
      %v1944 = vadd.f32 %v1750, %v1943
      %v1945 = vpop.f32.mrf.mxu0
      %1946 = vmatprep.mubr.f32.mxu0 0.0
      %v1947 = vand.u32 %v1342, 4294901760
      %v1948 = vsub.f32 %v1342, %v1947
      %1949 = vmatmul.mubr.f32.gmra.mxu0 %v1948
      %v1950 = vpop.f32.mrf.mxu0
      %v1951 = vadd.f32 %v1756, %v1950
      %v1952 = vpop.f32.mrf.mxu0
      %1953 = vmatprep.mubr.f32.mxu0 0.0
      %v1954 = vand.u32 %v1343, 4294901760
      %v1955 = vsub.f32 %v1343, %v1954
      %1956 = vmatmul.mubr.f32.gmra.mxu0 %v1955
      %v1957 = vpop.f32.mrf.mxu0
      %v1958 = vadd.f32 %v1762, %v1957
      %v1959 = vpop.f32.mrf.mxu0
      %1960 = vmatprep.mubr.f32.mxu0 0.0
      %v1961 = vand.u32 %v1344, 4294901760
      %v1962 = vsub.f32 %v1344, %v1961
      %1963 = vmatmul.mubr.f32.gmra.mxu0 %v1962
      %v1964 = vpop.f32.mrf.mxu0
      %v1965 = vadd.f32 %v1768, %v1964
      %v1966 = vpop.f32.mrf.mxu0
      %1967 = vmatprep.mubr.f32.mxu0 0.0
      %v1968 = vand.u32 %v1345, 4294901760
      %v1969 = vsub.f32 %v1345, %v1968
      %1970 = vmatmul.mubr.f32.gmra.mxu0 %v1969
      %v1971 = vpop.f32.mrf.mxu0
      %v1972 = vadd.f32 %v1774, %v1971
      %v1973 = vpop.f32.mrf.mxu0
      %1974 = vmatprep.mubr.f32.mxu0 0.0
      %v1975 = vand.u32 %v1346, 4294901760
      %v1976 = vsub.f32 %v1346, %v1975
      %1977 = vmatmul.mubr.f32.gmra.mxu0 %v1976
      %v1978 = vpop.f32.mrf.mxu0
      %v1979 = vadd.f32 %v1780, %v1978
      %v1980 = vpop.f32.mrf.mxu0
      %1981 = vmatprep.mubr.f32.mxu0 0.0
      %v1982 = vand.u32 %v1347, 4294901760
      %v1983 = vsub.f32 %v1347, %v1982
      %1984 = vmatmul.mubr.f32.gmra.mxu0 %v1983
      %v1985 = vpop.f32.mrf.mxu0
      %v1986 = vadd.f32 %v1786, %v1985
      %v1987 = vpop.f32.mrf.mxu0
      %1988 = vmatprep.mubr.f32.mxu0 0.0
      %v1989 = vand.u32 %v1348, 4294901760
      %v1990 = vsub.f32 %v1348, %v1989
      %1991 = vmatmul.mubr.f32.gmra.mxu0 %v1990
      %v1992 = vpop.f32.mrf.mxu0
      %v1993 = vadd.f32 %v1792, %v1992
      %v1994 = vpop.f32.mrf.mxu0
      %1995 = vmatprep.mubr.f32.mxu0 0.0
      %v1996 = vand.u32 %v1349, 4294901760
      %v1997 = vsub.f32 %v1349, %v1996
      %1998 = vmatmul.mubr.f32.gmra.mxu0 %v1997
      %v1999 = vpop.f32.mrf.mxu0
      %v2000 = vadd.f32 %v1798, %v1999
      %v2001 = vpop.f32.mrf.mxu0
      %2002 = vmatprep.mubr.f32.mxu0 0.0
      %v2003 = vand.u32 %v1350, 4294901760
      %v2004 = vsub.f32 %v1350, %v2003
      %2005 = vmatmul.mubr.f32.gmra.mxu0 %v2004
      %v2006 = vpop.f32.mrf.mxu0
      %v2007 = vadd.f32 %v1804, %v2006
      %v2008 = vpop.f32.mrf.mxu0
      %2009 = vmatprep.mubr.f32.mxu0 0.0
      %v2010 = vand.u32 %v1351, 4294901760
      %v2011 = vsub.f32 %v1351, %v2010
      %2012 = vmatmul.mubr.f32.gmra.mxu0 %v2011
      %v2013 = vpop.f32.mrf.mxu0
      %v2014 = vadd.f32 %v1810, %v2013
      %v2015 = vpop.f32.mrf.mxu0
      %2016 = vmatprep.mubr.f32.mxu0 0.0
      %v2017 = vand.u32 %v1352, 4294901760
      %v2018 = vsub.f32 %v1352, %v2017
      %2019 = vmatmul.mubr.f32.gmra.mxu0 %v2018
      %v2020 = vpop.f32.mrf.mxu0
      %v2021 = vadd.f32 %v1816, %v2020
      %v2022 = vpop.f32.mrf.mxu0
      %2023 = vmatprep.mubr.f32.mxu0 0.0
      %v2024 = vand.u32 %v1353, 4294901760
      %v2025 = vsub.f32 %v1353, %v2024
      %2026 = vmatmul.mubr.f32.gmra.mxu0 %v2025
      %v2027 = vpop.f32.mrf.mxu0
      %v2028 = vadd.f32 %v1822, %v2027
      %v2029 = vpop.f32.mrf.mxu0
      %2030 = vmatprep.mubr.f32.mxu0 0.0
      %v2031 = vand.u32 %v1354, 4294901760
      %v2032 = vsub.f32 %v1354, %v2031
      %2033 = vmatmul.mubr.f32.gmra.mxu0 %v2032
      %v2034 = vpop.f32.mrf.mxu0
      %v2035 = vadd.f32 %v1828, %v2034
      %v2036 = vpop.f32.mrf.mxu0
      %2037 = vmatprep.mubr.f32.mxu0 0.0
      %v2038 = vand.u32 %v1355, 4294901760
      %v2039 = vsub.f32 %v1355, %v2038
      %2040 = vmatmul.mubr.f32.gmra.mxu0 %v2039
      %v2041 = vpop.f32.mrf.mxu0
      %v2042 = vadd.f32 %v1834, %v2041
      %v2043 = vpop.f32.mrf.mxu0
      %2044 = vmatprep.mubr.f32.mxu0 0.0
      %v2045 = vand.u32 %v1356, 4294901760
      %v2046 = vsub.f32 %v1356, %v2045
      %2047 = vmatmul.mubr.f32.gmra.mxu0 %v2046
      %v2048 = vpop.f32.mrf.mxu0
      %v2049 = vadd.f32 %v1840, %v2048
      %v2050 = vpop.f32.mrf.mxu0
      %2051 = vdwg.mxu0
      %2052 = vmatprep.subr.mxu0 0.0
      %v2053 = vand.u32 %v180, 4294901760
      %2054 = vmatpush1.msra.mxu0 %v2053
      %2055 = vmatprep.subr.mxu0 0.0
      %v2056 = vand.u32 %v179, 4294901760
      %2057 = vmatpush1.msra.mxu0 %v2056
      %2058 = vmatprep.subr.mxu0 0.0
      %v2059 = vand.u32 %v178, 4294901760
      %2060 = vmatpush1.msra.mxu0 %v2059
      %2061 = vmatprep.subr.mxu0 0.0
      %v2062 = vand.u32 %v177, 4294901760
      %2063 = vmatpush1.msra.mxu0 %v2062
      %2064 = vmatprep.subr.mxu0 0.0
      %v2065 = vand.u32 %v176, 4294901760
      %2066 = vmatpush1.msra.mxu0 %v2065
      %2067 = vmatprep.subr.mxu0 0.0
      %v2068 = vand.u32 %v175, 4294901760
      %2069 = vmatpush1.msra.mxu0 %v2068
      %2070 = vmatprep.subr.mxu0 0.0
      %v2071 = vand.u32 %v174, 4294901760
      %2072 = vmatpush1.msra.mxu0 %v2071
      %2073 = vmatprep.subr.mxu0 0.0
      %v2074 = vand.u32 %v173, 4294901760
      %2075 = vmatpush1.msra.mxu0 %v2074
      %2076 = vmatprep.subr.mxu0 0.0
      %v2077 = vand.u32 %v172, 4294901760
      %2078 = vmatpush1.msra.mxu0 %v2077
      %2079 = vmatprep.subr.mxu0 0.0
      %v2080 = vand.u32 %v171, 4294901760
      %2081 = vmatpush1.msra.mxu0 %v2080
      %2082 = vmatprep.subr.mxu0 0.0
      %v2083 = vand.u32 %v170, 4294901760
      %2084 = vmatpush1.msra.mxu0 %v2083
      %2085 = vmatprep.subr.mxu0 0.0
      %v2086 = vand.u32 %v169, 4294901760
      %2087 = vmatpush1.msra.mxu0 %v2086
      %2088 = vmatprep.subr.mxu0 0.0
      %v2089 = vand.u32 %v168, 4294901760
      %2090 = vmatpush1.msra.mxu0 %v2089
      %2091 = vmatprep.subr.mxu0 0.0
      %v2092 = vand.u32 %v167, 4294901760
      %2093 = vmatpush1.msra.mxu0 %v2092
      %2094 = vmatprep.subr.mxu0 0.0
      %v2095 = vand.u32 %v166, 4294901760
      %2096 = vmatpush1.msra.mxu0 %v2095
      %2097 = vmatprep.subr.mxu0 0.0
      %v2098 = vand.u32 %v165, 4294901760
      %2099 = vmatpush1.msra.mxu0 %v2098
      %2100 = vmatprep.subr.mxu0 0.0
      %2101 = vmatpush2.msra.mxu0 0.0
      %2102 = vmatprep.subr.mxu0 0.0
      %2103 = vmatpush2.msra.mxu0 0.0
      %2104 = vmatprep.subr.mxu0 0.0
      %2105 = vmatpush2.msra.mxu0 0.0
      %2106 = vmatprep.subr.mxu0 0.0
      %2107 = vmatpush2.msra.mxu0 0.0
      %2108 = vmatprep.subr.mxu0 0.0
      %2109 = vmatpush2.msra.mxu0 0.0
      %2110 = vmatprep.subr.mxu0 0.0
      %2111 = vmatpush2.msra.mxu0 0.0
      %2112 = vmatprep.subr.mxu0 0.0
      %2113 = vmatpush2.msra.mxu0 0.0
      %2114 = vmatprep.subr.mxu0 0.0
      %2115 = vmatpush2.msra.mxu0 0.0
      %2116 = vmatprep.subr.mxu0 0.0
      %2117 = vmatpush2.msra.mxu0 0.0
      %2118 = vmatprep.subr.mxu0 0.0
      %2119 = vmatpush2.msra.mxu0 0.0
      %2120 = vmatprep.subr.mxu0 0.0
      %2121 = vmatpush2.msra.mxu0 0.0
      %2122 = vmatprep.subr.mxu0 0.0
      %2123 = vmatpush2.msra.mxu0 0.0
      %2124 = vmatprep.subr.mxu0 0.0
      %2125 = vmatpush2.msra.mxu0 0.0
      %2126 = vmatprep.subr.mxu0 0.0
      %2127 = vmatpush2.msra.mxu0 0.0
      %2128 = vmatprep.subr.mxu0 0.0
      %2129 = vmatpush2.msra.mxu0 0.0
      %2130 = vmatprep.subr.mxu0 0.0
      %2131 = vmatpush2.msra.mxu0 0.0
      %2132 = vmatprep.mubr.f32.mxu0 0.0
      %v2133 = vand.u32 %v1341, 4294901760
      %v2134 = vsub.f32 %v1341, %v2133
      %v2135 = vand.u32 %v2134, 4294901760
      %2136 = vmatmul.mubr.f32.gmra.mxu0 %v2135
      %v2137 = vpop.f32.mrf.mxu0
      %v2138 = vadd.f32 %v1944, %v2137
      %v2139 = vpop.f32.mrf.mxu0
      %2140 = vmatprep.mubr.f32.mxu0 0.0
      %v2141 = vand.u32 %v1342, 4294901760
      %v2142 = vsub.f32 %v1342, %v2141
      %v2143 = vand.u32 %v2142, 4294901760
      %2144 = vmatmul.mubr.f32.gmra.mxu0 %v2143
      %v2145 = vpop.f32.mrf.mxu0
      %v2146 = vadd.f32 %v1951, %v2145
      %v2147 = vpop.f32.mrf.mxu0
      %2148 = vmatprep.mubr.f32.mxu0 0.0
      %v2149 = vand.u32 %v1343, 4294901760
      %v2150 = vsub.f32 %v1343, %v2149
      %v2151 = vand.u32 %v2150, 4294901760
      %2152 = vmatmul.mubr.f32.gmra.mxu0 %v2151
      %v2153 = vpop.f32.mrf.mxu0
      %v2154 = vadd.f32 %v1958, %v2153
      %v2155 = vpop.f32.mrf.mxu0
      %2156 = vmatprep.mubr.f32.mxu0 0.0
      %v2157 = vand.u32 %v1344, 4294901760
      %v2158 = vsub.f32 %v1344, %v2157
      %v2159 = vand.u32 %v2158, 4294901760
      %2160 = vmatmul.mubr.f32.gmra.mxu0 %v2159
      %v2161 = vpop.f32.mrf.mxu0
      %v2162 = vadd.f32 %v1965, %v2161
      %v2163 = vpop.f32.mrf.mxu0
      %2164 = vmatprep.mubr.f32.mxu0 0.0
      %v2165 = vand.u32 %v1345, 4294901760
      %v2166 = vsub.f32 %v1345, %v2165
      %v2167 = vand.u32 %v2166, 4294901760
      %2168 = vmatmul.mubr.f32.gmra.mxu0 %v2167
      %v2169 = vpop.f32.mrf.mxu0
      %v2170 = vadd.f32 %v1972, %v2169
      %v2171 = vpop.f32.mrf.mxu0
      %2172 = vmatprep.mubr.f32.mxu0 0.0
      %v2173 = vand.u32 %v1346, 4294901760
      %v2174 = vsub.f32 %v1346, %v2173
      %v2175 = vand.u32 %v2174, 4294901760
      %2176 = vmatmul.mubr.f32.gmra.mxu0 %v2175
      %v2177 = vpop.f32.mrf.mxu0
      %v2178 = vadd.f32 %v1979, %v2177
      %v2179 = vpop.f32.mrf.mxu0
      %2180 = vmatprep.mubr.f32.mxu0 0.0
      %v2181 = vand.u32 %v1347, 4294901760
      %v2182 = vsub.f32 %v1347, %v2181
      %v2183 = vand.u32 %v2182, 4294901760
      %2184 = vmatmul.mubr.f32.gmra.mxu0 %v2183
      %v2185 = vpop.f32.mrf.mxu0
      %v2186 = vadd.f32 %v1986, %v2185
      %v2187 = vpop.f32.mrf.mxu0
      %2188 = vmatprep.mubr.f32.mxu0 0.0
      %v2189 = vand.u32 %v1348, 4294901760
      %v2190 = vsub.f32 %v1348, %v2189
      %v2191 = vand.u32 %v2190, 4294901760
      %2192 = vmatmul.mubr.f32.gmra.mxu0 %v2191
      %v2193 = vpop.f32.mrf.mxu0
      %v2194 = vadd.f32 %v1993, %v2193
      %v2195 = vpop.f32.mrf.mxu0
      %2196 = vmatprep.mubr.f32.mxu0 0.0
      %v2197 = vand.u32 %v1349, 4294901760
      %v2198 = vsub.f32 %v1349, %v2197
      %v2199 = vand.u32 %v2198, 4294901760
      %2200 = vmatmul.mubr.f32.gmra.mxu0 %v2199
      %v2201 = vpop.f32.mrf.mxu0
      %v2202 = vadd.f32 %v2000, %v2201
      %v2203 = vpop.f32.mrf.mxu0
      %2204 = vmatprep.mubr.f32.mxu0 0.0
      %v2205 = vand.u32 %v1350, 4294901760
      %v2206 = vsub.f32 %v1350, %v2205
      %v2207 = vand.u32 %v2206, 4294901760
      %2208 = vmatmul.mubr.f32.gmra.mxu0 %v2207
      %v2209 = vpop.f32.mrf.mxu0
      %v2210 = vadd.f32 %v2007, %v2209
      %v2211 = vpop.f32.mrf.mxu0
      %2212 = vmatprep.mubr.f32.mxu0 0.0
      %v2213 = vand.u32 %v1351, 4294901760
      %v2214 = vsub.f32 %v1351, %v2213
      %v2215 = vand.u32 %v2214, 4294901760
      %2216 = vmatmul.mubr.f32.gmra.mxu0 %v2215
      %v2217 = vpop.f32.mrf.mxu0
      %v2218 = vadd.f32 %v2014, %v2217
      %v2219 = vpop.f32.mrf.mxu0
      %2220 = vmatprep.mubr.f32.mxu0 0.0
      %v2221 = vand.u32 %v1352, 4294901760
      %v2222 = vsub.f32 %v1352, %v2221
      %v2223 = vand.u32 %v2222, 4294901760
      %2224 = vmatmul.mubr.f32.gmra.mxu0 %v2223
      %v2225 = vpop.f32.mrf.mxu0
      %v2226 = vadd.f32 %v2021, %v2225
      %v2227 = vpop.f32.mrf.mxu0
      %2228 = vmatprep.mubr.f32.mxu0 0.0
      %v2229 = vand.u32 %v1353, 4294901760
      %v2230 = vsub.f32 %v1353, %v2229
      %v2231 = vand.u32 %v2230, 4294901760
      %2232 = vmatmul.mubr.f32.gmra.mxu0 %v2231
      %v2233 = vpop.f32.mrf.mxu0
      %v2234 = vadd.f32 %v2028, %v2233
      %v2235 = vpop.f32.mrf.mxu0
      %2236 = vmatprep.mubr.f32.mxu0 0.0
      %v2237 = vand.u32 %v1354, 4294901760
      %v2238 = vsub.f32 %v1354, %v2237
      %v2239 = vand.u32 %v2238, 4294901760
      %2240 = vmatmul.mubr.f32.gmra.mxu0 %v2239
      %v2241 = vpop.f32.mrf.mxu0
      %v2242 = vadd.f32 %v2035, %v2241
      %v2243 = vpop.f32.mrf.mxu0
      %2244 = vmatprep.mubr.f32.mxu0 0.0
      %v2245 = vand.u32 %v1355, 4294901760
      %v2246 = vsub.f32 %v1355, %v2245
      %v2247 = vand.u32 %v2246, 4294901760
      %2248 = vmatmul.mubr.f32.gmra.mxu0 %v2247
      %v2249 = vpop.f32.mrf.mxu0
      %v2250 = vadd.f32 %v2042, %v2249
      %v2251 = vpop.f32.mrf.mxu0
      %2252 = vmatprep.mubr.f32.mxu0 0.0
      %v2253 = vand.u32 %v1356, 4294901760
      %v2254 = vsub.f32 %v1356, %v2253
      %v2255 = vand.u32 %v2254, 4294901760
      %2256 = vmatmul.mubr.f32.gmra.mxu0 %v2255
      %v2257 = vpop.f32.mrf.mxu0
      %v2258 = vadd.f32 %v2049, %v2257
      %v2259 = vpop.f32.mrf.mxu0
      %2260 = vdwg.mxu0
      %2261 = vmatprep.subr.mxu0 0.0
      %v2262 = vand.u32 %v180, 4294901760
      %v2263 = vsub.f32 %v180, %v2262
      %v2264 = vand.u32 %v2263, 4294901760
      %2265 = vmatpush1.msra.mxu0 %v2264
      %2266 = vmatprep.subr.mxu0 0.0
      %v2267 = vand.u32 %v179, 4294901760
      %v2268 = vsub.f32 %v179, %v2267
      %v2269 = vand.u32 %v2268, 4294901760
      %2270 = vmatpush1.msra.mxu0 %v2269
      %2271 = vmatprep.subr.mxu0 0.0
      %v2272 = vand.u32 %v178, 4294901760
      %v2273 = vsub.f32 %v178, %v2272
      %v2274 = vand.u32 %v2273, 4294901760
      %2275 = vmatpush1.msra.mxu0 %v2274
      %2276 = vmatprep.subr.mxu0 0.0
      %v2277 = vand.u32 %v177, 4294901760
      %v2278 = vsub.f32 %v177, %v2277
      %v2279 = vand.u32 %v2278, 4294901760
      %2280 = vmatpush1.msra.mxu0 %v2279
      %2281 = vmatprep.subr.mxu0 0.0
      %v2282 = vand.u32 %v176, 4294901760
      %v2283 = vsub.f32 %v176, %v2282
      %v2284 = vand.u32 %v2283, 4294901760
      %2285 = vmatpush1.msra.mxu0 %v2284
      %2286 = vmatprep.subr.mxu0 0.0
      %v2287 = vand.u32 %v175, 4294901760
      %v2288 = vsub.f32 %v175, %v2287
      %v2289 = vand.u32 %v2288, 4294901760
      %2290 = vmatpush1.msra.mxu0 %v2289
      %2291 = vmatprep.subr.mxu0 0.0
      %v2292 = vand.u32 %v174, 4294901760
      %v2293 = vsub.f32 %v174, %v2292
      %v2294 = vand.u32 %v2293, 4294901760
      %2295 = vmatpush1.msra.mxu0 %v2294
      %2296 = vmatprep.subr.mxu0 0.0
      %v2297 = vand.u32 %v173, 4294901760
      %v2298 = vsub.f32 %v173, %v2297
      %v2299 = vand.u32 %v2298, 4294901760
      %2300 = vmatpush1.msra.mxu0 %v2299
      %2301 = vmatprep.subr.mxu0 0.0
      %v2302 = vand.u32 %v172, 4294901760
      %v2303 = vsub.f32 %v172, %v2302
      %v2304 = vand.u32 %v2303, 4294901760
      %2305 = vmatpush1.msra.mxu0 %v2304
      %2306 = vmatprep.subr.mxu0 0.0
      %v2307 = vand.u32 %v171, 4294901760
      %v2308 = vsub.f32 %v171, %v2307
      %v2309 = vand.u32 %v2308, 4294901760
      %2310 = vmatpush1.msra.mxu0 %v2309
      %2311 = vmatprep.subr.mxu0 0.0
      %v2312 = vand.u32 %v170, 4294901760
      %v2313 = vsub.f32 %v170, %v2312
      %v2314 = vand.u32 %v2313, 4294901760
      %2315 = vmatpush1.msra.mxu0 %v2314
      %2316 = vmatprep.subr.mxu0 0.0
      %v2317 = vand.u32 %v169, 4294901760
      %v2318 = vsub.f32 %v169, %v2317
      %v2319 = vand.u32 %v2318, 4294901760
      %2320 = vmatpush1.msra.mxu0 %v2319
      %2321 = vmatprep.subr.mxu0 0.0
      %v2322 = vand.u32 %v168, 4294901760
      %v2323 = vsub.f32 %v168, %v2322
      %v2324 = vand.u32 %v2323, 4294901760
      %2325 = vmatpush1.msra.mxu0 %v2324
      %2326 = vmatprep.subr.mxu0 0.0
      %v2327 = vand.u32 %v167, 4294901760
      %v2328 = vsub.f32 %v167, %v2327
      %v2329 = vand.u32 %v2328, 4294901760
      %2330 = vmatpush1.msra.mxu0 %v2329
      %2331 = vmatprep.subr.mxu0 0.0
      %v2332 = vand.u32 %v166, 4294901760
      %v2333 = vsub.f32 %v166, %v2332
      %v2334 = vand.u32 %v2333, 4294901760
      %2335 = vmatpush1.msra.mxu0 %v2334
      %2336 = vmatprep.subr.mxu0 0.0
      %v2337 = vand.u32 %v165, 4294901760
      %v2338 = vsub.f32 %v165, %v2337
      %v2339 = vand.u32 %v2338, 4294901760
      %2340 = vmatpush1.msra.mxu0 %v2339
      %2341 = vmatprep.subr.mxu0 0.0
      %2342 = vmatpush2.msra.mxu0 0.0
      %2343 = vmatprep.subr.mxu0 0.0
      %2344 = vmatpush2.msra.mxu0 0.0
      %2345 = vmatprep.subr.mxu0 0.0
      %2346 = vmatpush2.msra.mxu0 0.0
      %2347 = vmatprep.subr.mxu0 0.0
      %2348 = vmatpush2.msra.mxu0 0.0
      %2349 = vmatprep.subr.mxu0 0.0
      %2350 = vmatpush2.msra.mxu0 0.0
      %2351 = vmatprep.subr.mxu0 0.0
      %2352 = vmatpush2.msra.mxu0 0.0
      %2353 = vmatprep.subr.mxu0 0.0
      %2354 = vmatpush2.msra.mxu0 0.0
      %2355 = vmatprep.subr.mxu0 0.0
      %2356 = vmatpush2.msra.mxu0 0.0
      %2357 = vmatprep.subr.mxu0 0.0
      %2358 = vmatpush2.msra.mxu0 0.0
      %2359 = vmatprep.subr.mxu0 0.0
      %2360 = vmatpush2.msra.mxu0 0.0
      %2361 = vmatprep.subr.mxu0 0.0
      %2362 = vmatpush2.msra.mxu0 0.0
      %2363 = vmatprep.subr.mxu0 0.0
      %2364 = vmatpush2.msra.mxu0 0.0
      %2365 = vmatprep.subr.mxu0 0.0
      %2366 = vmatpush2.msra.mxu0 0.0
      %2367 = vmatprep.subr.mxu0 0.0
      %2368 = vmatpush2.msra.mxu0 0.0
      %2369 = vmatprep.subr.mxu0 0.0
      %2370 = vmatpush2.msra.mxu0 0.0
      %2371 = vmatprep.subr.mxu0 0.0
      %2372 = vmatpush2.msra.mxu0 0.0
      %2373 = vmatprep.mubr.f32.mxu0 0.0
      %v2374 = vand.u32 %v1341, 4294901760
      %2375 = vmatmul.mubr.f32.gmra.mxu0 %v2374
      %v2376 = vpop.f32.mrf.mxu0
      %v2377 = vadd.f32 %v2138, %v2376
      %v2378 = vpop.f32.mrf.mxu0
      %2379 = vmatprep.mubr.f32.mxu0 0.0
      %v2380 = vand.u32 %v1342, 4294901760
      %2381 = vmatmul.mubr.f32.gmra.mxu0 %v2380
      %v2382 = vpop.f32.mrf.mxu0
      %v2383 = vadd.f32 %v2146, %v2382
      %v2384 = vpop.f32.mrf.mxu0
      %2385 = vmatprep.mubr.f32.mxu0 0.0
      %v2386 = vand.u32 %v1343, 4294901760
      %2387 = vmatmul.mubr.f32.gmra.mxu0 %v2386
      %v2388 = vpop.f32.mrf.mxu0
      %v2389 = vadd.f32 %v2154, %v2388
      %v2390 = vpop.f32.mrf.mxu0
      %2391 = vmatprep.mubr.f32.mxu0 0.0
      %v2392 = vand.u32 %v1344, 4294901760
      %2393 = vmatmul.mubr.f32.gmra.mxu0 %v2392
      %v2394 = vpop.f32.mrf.mxu0
      %v2395 = vadd.f32 %v2162, %v2394
      %v2396 = vpop.f32.mrf.mxu0
      %2397 = vmatprep.mubr.f32.mxu0 0.0
      %v2398 = vand.u32 %v1345, 4294901760
      %2399 = vmatmul.mubr.f32.gmra.mxu0 %v2398
      %v2400 = vpop.f32.mrf.mxu0
      %v2401 = vadd.f32 %v2170, %v2400
      %v2402 = vpop.f32.mrf.mxu0
      %2403 = vmatprep.mubr.f32.mxu0 0.0
      %v2404 = vand.u32 %v1346, 4294901760
      %2405 = vmatmul.mubr.f32.gmra.mxu0 %v2404
      %v2406 = vpop.f32.mrf.mxu0
      %v2407 = vadd.f32 %v2178, %v2406
      %v2408 = vpop.f32.mrf.mxu0
      %2409 = vmatprep.mubr.f32.mxu0 0.0
      %v2410 = vand.u32 %v1347, 4294901760
      %2411 = vmatmul.mubr.f32.gmra.mxu0 %v2410
      %v2412 = vpop.f32.mrf.mxu0
      %v2413 = vadd.f32 %v2186, %v2412
      %v2414 = vpop.f32.mrf.mxu0
      %2415 = vmatprep.mubr.f32.mxu0 0.0
      %v2416 = vand.u32 %v1348, 4294901760
      %2417 = vmatmul.mubr.f32.gmra.mxu0 %v2416
      %v2418 = vpop.f32.mrf.mxu0
      %v2419 = vadd.f32 %v2194, %v2418
      %v2420 = vpop.f32.mrf.mxu0
      %2421 = vmatprep.mubr.f32.mxu0 0.0
      %v2422 = vand.u32 %v1349, 4294901760
      %2423 = vmatmul.mubr.f32.gmra.mxu0 %v2422
      %v2424 = vpop.f32.mrf.mxu0
      %v2425 = vadd.f32 %v2202, %v2424
      %v2426 = vpop.f32.mrf.mxu0
      %2427 = vmatprep.mubr.f32.mxu0 0.0
      %v2428 = vand.u32 %v1350, 4294901760
      %2429 = vmatmul.mubr.f32.gmra.mxu0 %v2428
      %v2430 = vpop.f32.mrf.mxu0
      %v2431 = vadd.f32 %v2210, %v2430
      %v2432 = vpop.f32.mrf.mxu0
      %2433 = vmatprep.mubr.f32.mxu0 0.0
      %v2434 = vand.u32 %v1351, 4294901760
      %2435 = vmatmul.mubr.f32.gmra.mxu0 %v2434
      %v2436 = vpop.f32.mrf.mxu0
      %v2437 = vadd.f32 %v2218, %v2436
      %v2438 = vpop.f32.mrf.mxu0
      %2439 = vmatprep.mubr.f32.mxu0 0.0
      %v2440 = vand.u32 %v1352, 4294901760
      %2441 = vmatmul.mubr.f32.gmra.mxu0 %v2440
      %v2442 = vpop.f32.mrf.mxu0
      %v2443 = vadd.f32 %v2226, %v2442
      %v2444 = vpop.f32.mrf.mxu0
      %2445 = vmatprep.mubr.f32.mxu0 0.0
      %v2446 = vand.u32 %v1353, 4294901760
      %2447 = vmatmul.mubr.f32.gmra.mxu0 %v2446
      %v2448 = vpop.f32.mrf.mxu0
      %v2449 = vadd.f32 %v2234, %v2448
      %v2450 = vpop.f32.mrf.mxu0
      %2451 = vmatprep.mubr.f32.mxu0 0.0
      %v2452 = vand.u32 %v1354, 4294901760
      %2453 = vmatmul.mubr.f32.gmra.mxu0 %v2452
      %v2454 = vpop.f32.mrf.mxu0
      %v2455 = vadd.f32 %v2242, %v2454
      %v2456 = vpop.f32.mrf.mxu0
      %2457 = vmatprep.mubr.f32.mxu0 0.0
      %v2458 = vand.u32 %v1355, 4294901760
      %2459 = vmatmul.mubr.f32.gmra.mxu0 %v2458
      %v2460 = vpop.f32.mrf.mxu0
      %v2461 = vadd.f32 %v2250, %v2460
      %v2462 = vpop.f32.mrf.mxu0
      %2463 = vmatprep.mubr.f32.mxu0 0.0
      %v2464 = vand.u32 %v1356, 4294901760
      %2465 = vmatmul.mubr.f32.gmra.mxu0 %v2464
      %v2466 = vpop.f32.mrf.mxu0
      %v2467 = vadd.f32 %v2258, %v2466
      %v2468 = vpop.f32.mrf.mxu0
      %2469 = vdwg.mxu0
      %2470 = vmatprep.subr.mxu0 0.0
      %v2471 = vand.u32 %v180, 4294901760
      %2472 = vmatpush1.msra.mxu0 %v2471
      %2473 = vmatprep.subr.mxu0 0.0
      %v2474 = vand.u32 %v179, 4294901760
      %2475 = vmatpush1.msra.mxu0 %v2474
      %2476 = vmatprep.subr.mxu0 0.0
      %v2477 = vand.u32 %v178, 4294901760
      %2478 = vmatpush1.msra.mxu0 %v2477
      %2479 = vmatprep.subr.mxu0 0.0
      %v2480 = vand.u32 %v177, 4294901760
      %2481 = vmatpush1.msra.mxu0 %v2480
      %2482 = vmatprep.subr.mxu0 0.0
      %v2483 = vand.u32 %v176, 4294901760
      %2484 = vmatpush1.msra.mxu0 %v2483
      %2485 = vmatprep.subr.mxu0 0.0
      %v2486 = vand.u32 %v175, 4294901760
      %2487 = vmatpush1.msra.mxu0 %v2486
      %2488 = vmatprep.subr.mxu0 0.0
      %v2489 = vand.u32 %v174, 4294901760
      %2490 = vmatpush1.msra.mxu0 %v2489
      %2491 = vmatprep.subr.mxu0 0.0
      %v2492 = vand.u32 %v173, 4294901760
      %2493 = vmatpush1.msra.mxu0 %v2492
      %2494 = vmatprep.subr.mxu0 0.0
      %v2495 = vand.u32 %v172, 4294901760
      %2496 = vmatpush1.msra.mxu0 %v2495
      %2497 = vmatprep.subr.mxu0 0.0
      %v2498 = vand.u32 %v171, 4294901760
      %2499 = vmatpush1.msra.mxu0 %v2498
      %2500 = vmatprep.subr.mxu0 0.0
      %v2501 = vand.u32 %v170, 4294901760
      %2502 = vmatpush1.msra.mxu0 %v2501
      %2503 = vmatprep.subr.mxu0 0.0
      %v2504 = vand.u32 %v169, 4294901760
      %2505 = vmatpush1.msra.mxu0 %v2504
      %2506 = vmatprep.subr.mxu0 0.0
      %v2507 = vand.u32 %v168, 4294901760
      %2508 = vmatpush1.msra.mxu0 %v2507
      %2509 = vmatprep.subr.mxu0 0.0
      %v2510 = vand.u32 %v167, 4294901760
      %2511 = vmatpush1.msra.mxu0 %v2510
      %2512 = vmatprep.subr.mxu0 0.0
      %v2513 = vand.u32 %v166, 4294901760
      %2514 = vmatpush1.msra.mxu0 %v2513
      %2515 = vmatprep.subr.mxu0 0.0
      %v2516 = vand.u32 %v165, 4294901760
      %2517 = vmatpush1.msra.mxu0 %v2516
      %2518 = vmatprep.subr.mxu0 0.0
      %2519 = vmatpush2.msra.mxu0 0.0
      %2520 = vmatprep.subr.mxu0 0.0
      %2521 = vmatpush2.msra.mxu0 0.0
      %2522 = vmatprep.subr.mxu0 0.0
      %2523 = vmatpush2.msra.mxu0 0.0
      %2524 = vmatprep.subr.mxu0 0.0
      %2525 = vmatpush2.msra.mxu0 0.0
      %2526 = vmatprep.subr.mxu0 0.0
      %2527 = vmatpush2.msra.mxu0 0.0
      %2528 = vmatprep.subr.mxu0 0.0
      %2529 = vmatpush2.msra.mxu0 0.0
      %2530 = vmatprep.subr.mxu0 0.0
      %2531 = vmatpush2.msra.mxu0 0.0
      %2532 = vmatprep.subr.mxu0 0.0
      %2533 = vmatpush2.msra.mxu0 0.0
      %2534 = vmatprep.subr.mxu0 0.0
      %2535 = vmatpush2.msra.mxu0 0.0
      %2536 = vmatprep.subr.mxu0 0.0
      %2537 = vmatpush2.msra.mxu0 0.0
      %2538 = vmatprep.subr.mxu0 0.0
      %2539 = vmatpush2.msra.mxu0 0.0
      %2540 = vmatprep.subr.mxu0 0.0
      %2541 = vmatpush2.msra.mxu0 0.0
      %2542 = vmatprep.subr.mxu0 0.0
      %2543 = vmatpush2.msra.mxu0 0.0
      %2544 = vmatprep.subr.mxu0 0.0
      %2545 = vmatpush2.msra.mxu0 0.0
      %2546 = vmatprep.subr.mxu0 0.0
      %2547 = vmatpush2.msra.mxu0 0.0
      %2548 = vmatprep.subr.mxu0 0.0
      %2549 = vmatpush2.msra.mxu0 0.0
      %2550 = vmatprep.mubr.f32.mxu0 0.0
      %v2551 = vand.u32 %v1341, 4294901760
      %2552 = vmatmul.mubr.f32.gmra.mxu0 %v2551
      %v2553 = vpop.f32.mrf.mxu0
      %v2554 = vadd.f32 %v2377, %v2553
      %v2555 = vpop.f32.mrf.mxu0
      %2556 = vmatprep.mubr.f32.mxu0 0.0
      %v2557 = vand.u32 %v1342, 4294901760
      %2558 = vmatmul.mubr.f32.gmra.mxu0 %v2557
      %v2559 = vpop.f32.mrf.mxu0
      %v2560 = vadd.f32 %v2383, %v2559
      %v2561 = vpop.f32.mrf.mxu0
      %2562 = vmatprep.mubr.f32.mxu0 0.0
      %v2563 = vand.u32 %v1343, 4294901760
      %2564 = vmatmul.mubr.f32.gmra.mxu0 %v2563
      %v2565 = vpop.f32.mrf.mxu0
      %v2566 = vadd.f32 %v2389, %v2565
      %v2567 = vpop.f32.mrf.mxu0
      %2568 = vmatprep.mubr.f32.mxu0 0.0
      %v2569 = vand.u32 %v1344, 4294901760
      %2570 = vmatmul.mubr.f32.gmra.mxu0 %v2569
      %v2571 = vpop.f32.mrf.mxu0
      %v2572 = vadd.f32 %v2395, %v2571
      %v2573 = vpop.f32.mrf.mxu0
      %2574 = vmatprep.mubr.f32.mxu0 0.0
      %v2575 = vand.u32 %v1345, 4294901760
      %2576 = vmatmul.mubr.f32.gmra.mxu0 %v2575
      %v2577 = vpop.f32.mrf.mxu0
      %v2578 = vadd.f32 %v2401, %v2577
      %v2579 = vpop.f32.mrf.mxu0
      %2580 = vmatprep.mubr.f32.mxu0 0.0
      %v2581 = vand.u32 %v1346, 4294901760
      %2582 = vmatmul.mubr.f32.gmra.mxu0 %v2581
      %v2583 = vpop.f32.mrf.mxu0
      %v2584 = vadd.f32 %v2407, %v2583
      %v2585 = vpop.f32.mrf.mxu0
      %2586 = vmatprep.mubr.f32.mxu0 0.0
      %v2587 = vand.u32 %v1347, 4294901760
      %2588 = vmatmul.mubr.f32.gmra.mxu0 %v2587
      %v2589 = vpop.f32.mrf.mxu0
      %v2590 = vadd.f32 %v2413, %v2589
      %v2591 = vpop.f32.mrf.mxu0
      %2592 = vmatprep.mubr.f32.mxu0 0.0
      %v2593 = vand.u32 %v1348, 4294901760
      %2594 = vmatmul.mubr.f32.gmra.mxu0 %v2593
      %v2595 = vpop.f32.mrf.mxu0
      %v2596 = vadd.f32 %v2419, %v2595
      %v2597 = vpop.f32.mrf.mxu0
      %2598 = vmatprep.mubr.f32.mxu0 0.0
      %v2599 = vand.u32 %v1349, 4294901760
      %2600 = vmatmul.mubr.f32.gmra.mxu0 %v2599
      %v2601 = vpop.f32.mrf.mxu0
      %v2602 = vadd.f32 %v2425, %v2601
      %v2603 = vpop.f32.mrf.mxu0
      %2604 = vmatprep.mubr.f32.mxu0 0.0
      %v2605 = vand.u32 %v1350, 4294901760
      %2606 = vmatmul.mubr.f32.gmra.mxu0 %v2605
      %v2607 = vpop.f32.mrf.mxu0
      %v2608 = vadd.f32 %v2431, %v2607
      %v2609 = vpop.f32.mrf.mxu0
      %2610 = vmatprep.mubr.f32.mxu0 0.0
      %v2611 = vand.u32 %v1351, 4294901760
      %2612 = vmatmul.mubr.f32.gmra.mxu0 %v2611
      %v2613 = vpop.f32.mrf.mxu0
      %v2614 = vadd.f32 %v2437, %v2613
      %v2615 = vpop.f32.mrf.mxu0
      %2616 = vmatprep.mubr.f32.mxu0 0.0
      %v2617 = vand.u32 %v1352, 4294901760
      %2618 = vmatmul.mubr.f32.gmra.mxu0 %v2617
      %v2619 = vpop.f32.mrf.mxu0
      %v2620 = vadd.f32 %v2443, %v2619
      %v2621 = vpop.f32.mrf.mxu0
      %2622 = vmatprep.mubr.f32.mxu0 0.0
      %v2623 = vand.u32 %v1353, 4294901760
      %2624 = vmatmul.mubr.f32.gmra.mxu0 %v2623
      %v2625 = vpop.f32.mrf.mxu0
      %v2626 = vadd.f32 %v2449, %v2625
      %v2627 = vpop.f32.mrf.mxu0
      %2628 = vmatprep.mubr.f32.mxu0 0.0
      %v2629 = vand.u32 %v1354, 4294901760
      %2630 = vmatmul.mubr.f32.gmra.mxu0 %v2629
      %v2631 = vpop.f32.mrf.mxu0
      %v2632 = vadd.f32 %v2455, %v2631
      %v2633 = vpop.f32.mrf.mxu0
      %2634 = vmatprep.mubr.f32.mxu0 0.0
      %v2635 = vand.u32 %v1355, 4294901760
      %2636 = vmatmul.mubr.f32.gmra.mxu0 %v2635
      %v2637 = vpop.f32.mrf.mxu0
      %v2638 = vadd.f32 %v2461, %v2637
      %v2639 = vpop.f32.mrf.mxu0
      %2640 = vmatprep.mubr.f32.mxu0 0.0
      %v2641 = vand.u32 %v1356, 4294901760
      %2642 = vmatmul.mubr.f32.gmra.mxu0 %v2641
      %v2643 = vpop.f32.mrf.mxu0
      %v2644 = vadd.f32 %v2467, %v2643
      %v2645 = vpop.f32.mrf.mxu0
      %2646 = vdwg.mxu0
      %2647 = vst [vmem:[%s145] sm:$0xff] %v2554
      %2648 = vst [vmem:[%s145 + $0x8] sm:$0xff] %v2560
      %2649 = vst [vmem:[%s145 + $0x10] sm:$0xff] %v2566
      %2650 = vst [vmem:[%s145 + $0x18] sm:$0xff] %v2572
      %2651 = vst [vmem:[%s145 + $0x20] sm:$0xff] %v2578
      %2652 = vst [vmem:[%s145 + $0x28] sm:$0xff] %v2584
      %2653 = vst [vmem:[%s145 + $0x30] sm:$0xff] %v2590
      %2654 = vst [vmem:[%s145 + $0x38] sm:$0xff] %v2596
      %2655 = vst [vmem:[%s145 + $0x40] sm:$0xff] %v2602
      %2656 = vst [vmem:[%s145 + $0x48] sm:$0xff] %v2608
      %2657 = vst [vmem:[%s145 + $0x50] sm:$0xff] %v2614
      %2658 = vst [vmem:[%s145 + $0x58] sm:$0xff] %v2620
      %2659 = vst [vmem:[%s145 + $0x60] sm:$0xff] %v2626
      %2660 = vst [vmem:[%s145 + $0x68] sm:$0xff] %v2632
      %2661 = vst [vmem:[%s145 + $0x70] sm:$0xff] %v2638
      %2662 = vst [vmem:[%s145 + $0x78] sm:$0xff] %v2644
      %s2663 = smul.u32 16, %s13
      %p2664 = scmp.lt.s32.totalorder %s2663, 31
      %s2665 = scalar_select %p2664, %s2663, 31
      %s2666 = smul.addr %s2665, 8
      %s2667 = scalar_lea.vmem %s2, %s2666
      // Predicated region
      $region29: #{decoder_forward.1} parent=27 // pred_check
        %p2668 = pneg %p78
      $region30: #{decoder_forward.1} parent=27 // pred_check_branch
        %2670 = sbr.rel (%p2668) target = $region32
      $region31: #{decoder_forward.1} parent=27 // pred_region
        %s2671 = smul.u32 16, %s13
      $region32: #{decoder_forward.1} parent=27 // pred_fallthru
        _
    $region28: #{decoder_forward.1} parent=5 // pred_fallthru
      _
    %p2672 = scmp.le.s32.totalorder 2, %s8
    // Predicated region
    $region33: #{decoder_forward.1} parent=5 // pred_check
      %p2673 = pneg %p2672
    $region34: #{decoder_forward.1} parent=5 // pred_check_branch
      %2675 = sbr.rel (%p2673) target = $region36
    $region35: #{decoder_forward.1} parent=5 // pred_region
      %s2676 = ssub.s32 %s8, 2
      // Predicated region
      $region37: #{decoder_forward.1} parent=35 // pred_check
        %p2677 = pneg %p84
      $region38: #{decoder_forward.1} parent=35 // pred_check_branch
        %2679 = sbr.rel (%p2677) target = $region40
      $region39: #{decoder_forward.1} parent=35 // pred_region
        %s2680 = smul.u32 16, %s14
        %p2681 = scmp.lt.s32.totalorder %s2680, 31
        %s2682 = scalar_select %p2681, %s2680, 31
        %s2683 = smul.addr %s2682, 8
        %s2684 = scalar_lea.vmem %s2, %s2683
      $region40: #{decoder_forward.1} parent=35 // pred_fallthru
        _
    $region36: #{decoder_forward.1} parent=5 // pred_fallthru
      _
  $region6: #{decoder_forward.1} parent=0 // loop_footer
    %s12 = sadd.s32 1, %s8
  $region7: #{decoder_forward.1} parent=0 // loop_footer_branch
    %7 = sbr.rel target = $region3
  $region8: #{decoder_forward.1} parent=0 // loop_exit
    _

</llo_original>
